<compile_context>
chip_gen: v6e
topology: v6e:2x2x1
jax: 0.10.0
libtpu: 0.0.40
codegen_flags: <defaults>
</compile_context>

<pallas_src>
import functools

import jax
import jax.numpy as jnp
from jax import lax
from jax.experimental import pallas as pl
from jax.experimental.pallas import tpu as pltpu

INPUT_DATA_DIM = 784
HIDDEN_DIM = 400
ETA = 1e-06

_BATCH_TILE_CAP = 512   # ~8 MB working set at f32/bf16 mix, well under VMEM


def _round_up(x, m):
    return ((x + m - 1) // m) * m


@functools.lru_cache(maxsize=1)
def _num_tensorcores():
    """Best-effort TensorCores-per-device query (v7x megacore split)."""
    # TODO(synk): confirm the TpuInfo field name for cores-per-chip; fall back
    # to 1 (single-TC behaviour, correct on v5e/v6e and in interpret mode).
    try:
        dev = jax.devices()[0]
        if dev.platform != "tpu":
            return 1
        info = pltpu.get_tpu_info()
        for name in ("num_cores", "tensor_cores_per_chip", "cores_per_chip",
                     "num_tensorcores"):
            n = getattr(info, name, None)
            if n:
                return int(n)
    except Exception:
        pass
    return 1


def _encoder_kernel(latent_dim, latent_dim_w,
                    x_ref, w1_ref, b1_ref, wf_ref, bf_ref, out_ref):
    l_tot = latent_dim + latent_dim_w

    # hidden layer:  h = relu(x @ W1 + b1)   (bf16 MXU matmul, f32 accumulate)
    h = jnp.dot(x_ref[...], w1_ref[...], preferred_element_type=jnp.float32)
    h = jnp.maximum(h + b1_ref[...], 0.0)

    # fused heads: lanes [0, l_tot) = mu, [l_tot, 2*l_tot) = logvar, rest = 0
    head = jnp.dot(h.astype(wf_ref.dtype), wf_ref[...],
                   preferred_element_type=jnp.float32)
    head = head + bf_ref[...]

    # segmented softmax over the logvar lanes using iota masks (no lane slices)
    col = lax.broadcasted_iota(jnp.int32, head.shape, 1)
    mu_mask = col < l_tot
    u_mask = (col >= l_tot) & (col < l_tot + latent_dim)
    w_mask = (col >= l_tot + latent_dim) & (col < 2 * l_tot)
    soft_mask = u_mask | w_mask

    neg_inf = jnp.float32(-jnp.inf)
    max_u = jnp.max(jnp.where(u_mask, head, neg_inf), axis=-1, keepdims=True)
    max_w = jnp.max(jnp.where(w_mask, head, neg_inf), axis=-1, keepdims=True)
    m_lane = jnp.where(u_mask, max_u, jnp.where(w_mask, max_w, 0.0))

    # exp only on the softmax lanes (others forced to exp(0) = 1, never used)
    e = jnp.exp(jnp.where(soft_mask, head - m_lane, 0.0))
    sum_u = jnp.sum(jnp.where(u_mask, e, 0.0), axis=-1, keepdims=True)
    sum_w = jnp.sum(jnp.where(w_mask, e, 0.0), axis=-1, keepdims=True)
    denom = jnp.where(u_mask, sum_u, jnp.where(w_mask, sum_w, 1.0))
    scale = jnp.where(u_mask, jnp.float32(latent_dim),
                      jnp.where(w_mask, jnp.float32(latent_dim_w), 0.0))

    # Exact divide (the approx EUP reciprocal failed the numerical self-check;
    # this epilogue has ample VPU/EUP slack under the MXU anyway).
    soft = e * scale / denom + ETA

    # single lane-dense store: [mu | transformed logvar | zeros]
    out_ref[...] = jnp.where(mu_mask, head, jnp.where(soft_mask, soft, 0.0))


def prepare_params(params, latent_dim, latent_dim_w):
    """One-time parameter prep: fuse heads, pad to 128 lanes, cast to bf16."""
    w1, b1, wmu, bmu, wlv, blv = params
    l_tot = latent_dim + latent_dim_w
    n_heads = 2 * l_tot
    n_out = _round_up(n_heads, 128)            # lane-dense fused output width

    wf = jnp.concatenate([wmu, wlv], axis=1)
    bf = jnp.concatenate([bmu, blv], axis=1)
    if n_out > n_heads:
        wf = jnp.pad(wf, ((0, 0), (0, n_out - n_heads)))
        bf = jnp.pad(bf, ((0, 0), (0, n_out - n_heads)))

    # matmul operands in bf16 (MXU native); biases stay f32 for the epilogue
    return (w1.astype(jnp.bfloat16), b1.astype(jnp.float32),
            wf.astype(jnp.bfloat16), bf.astype(jnp.float32))


@functools.partial(jax.jit, static_argnames=("latent_dim", "latent_dim_w"))
def mnist_encoder_plus(x, prepared, latent_dim, latent_dim_w):
    """x: (B, 1, 28, 28) float32 (NCHW).  Returns (mu_w, lv_w, mu_u, lv_u)."""
    w1, b1, wf, bf = prepared
    B = x.shape[0]
    h = x.reshape(B, -1).astype(jnp.bfloat16)  # same flatten as torch .view
    assert h.shape[1] == INPUT_DATA_DIM
    n_out = wf.shape[1]
    l_tot = latent_dim + latent_dim_w

    # batch tiling: minimize padding, cap at 512 rows, and on multi-TC chips
    # (v7x) use >=2 grid steps for B >= 16 so "parallel" splits across cores.
    n_steps = pl.cdiv(B, _BATCH_TILE_CAP)
    cores = _num_tensorcores()
    if cores > 1 and B >= 16:
        n_steps = max(n_steps, cores)
    tb = _round_up(pl.cdiv(B, n_steps), 16)    # 16: bf16 sublane-pack friendly
    b_pad = n_steps * tb
    if b_pad > B:
        h = jnp.pad(h, ((0, b_pad - B), (0, 0)))

    kernel = functools.partial(_encoder_kernel, latent_dim, latent_dim_w)

    out = pl.pallas_call(
        kernel,
        grid=(n_steps,),
        in_specs=[
            pl.BlockSpec((tb, INPUT_DATA_DIM), lambda b: (b, 0)),
            pl.BlockSpec((INPUT_DATA_DIM, HIDDEN_DIM), lambda b: (0, 0)),
            pl.BlockSpec((1, HIDDEN_DIM), lambda b: (0, 0)),
            pl.BlockSpec((HIDDEN_DIM, n_out), lambda b: (0, 0)),
            pl.BlockSpec((1, n_out), lambda b: (0, 0)),
        ],
        out_specs=pl.BlockSpec((tb, n_out), lambda b: (b, 0)),
        out_shape=jax.ShapeDtypeStruct((b_pad, n_out), jnp.float32),
        compiler_params=pltpu.CompilerParams(
            dimension_semantics=("parallel",)),
    )(h, w1, b1, wf, bf)

    # cheap XLA slices in the wrapper (keeps kernel output lane-dense)
    out = out[:B]
    mu = out[:, :l_tot]
    lvt = out[:, l_tot:2 * l_tot]
    mu_u, mu_w = mu[:, :latent_dim], mu[:, latent_dim:]
    lv_u_t, lv_w_t = lvt[:, :latent_dim], lvt[:, latent_dim:]
    return (mu_w, lv_w_t, mu_u, lv_u_t)


def init_params(key, latent_dim, latent_dim_w):
    """Deterministic synthetic parameters (shapes match the torch module)."""
    l_tot = latent_dim + latent_dim_w
    ks = jax.random.split(key, 6)
    scale1 = 1.0 / jnp.sqrt(INPUT_DATA_DIM)
    scale2 = 1.0 / jnp.sqrt(HIDDEN_DIM)
    # stored as (in, out) so the kernel does x @ W + b
    w1 = jax.random.uniform(ks[0], (INPUT_DATA_DIM, HIDDEN_DIM), jnp.float32,
                            -scale1, scale1)
    b1 = jax.random.uniform(ks[1], (1, HIDDEN_DIM), jnp.float32, -scale1, scale1)
    wmu = jax.random.uniform(ks[2], (HIDDEN_DIM, l_tot), jnp.float32,
                             -scale2, scale2)
    bmu = jax.random.uniform(ks[3], (1, l_tot), jnp.float32, -scale2, scale2)
    wlv = jax.random.uniform(ks[4], (HIDDEN_DIM, l_tot), jnp.float32,
                             -scale2, scale2)
    blv = jax.random.uniform(ks[5], (1, l_tot), jnp.float32, -scale2, scale2)
    return (w1, b1, wmu, bmu, wlv, blv)


def _reference(x, params, latent_dim):
    """Plain-JAX f32 reference matching the torch forward."""
    w1, b1, wmu, bmu, wlv, blv = params
    h = x.reshape(x.shape[0], -1)
    h = jnp.maximum(h @ w1 + b1, 0.0)
    mu = h @ wmu + bmu
    lv = h @ wlv + blv
    mu_u, mu_w = mu[:, :latent_dim], mu[:, latent_dim:]
    l_u, l_w = lv[:, :latent_dim], lv[:, latent_dim:]
    return (mu_w,
            jax.nn.softmax(l_w, axis=-1) * l_w.shape[-1] + ETA,
            mu_u,
            jax.nn.softmax(l_u, axis=-1) * l_u.shape[-1] + ETA)


if __name__ == "__main__":
    latent_dim = 16
    latent_dim_w = 16
    batch = 4

    key = jax.random.PRNGKey(0)
    k_x, k_p = jax.random.split(key)
    x = jax.random.normal(k_x, (batch, 1, 28, 28), jnp.float32)
    params = init_params(k_p, latent_dim, latent_dim_w)
    prepared = prepare_params(params, latent_dim, latent_dim_w)

    outs = mnist_encoder_plus(x, prepared, latent_dim, latent_dim_w)
    outs = jax.block_until_ready(outs)

    refs = _reference(x, params, latent_dim)
    # Tolerance 2e-2: kernel matmuls use bf16 inputs (f32 accumulation);
    # estimated worst-case deviation from the f32 reference is a few 1e-3.
    for o, r in zip(outs, refs):
        assert o.shape == r.shape, (o.shape, r.shape)
        assert jnp.allclose(o, r, atol=2e-2, rtol=2e-2), "mismatch vs reference"

    print("KERNEL_OK")
</pallas_src>

<mosaic_0001>
module attributes {stable_mosaic.version = 11 : i64} {
  func.func @_encoder_kernel(%arg0: i32, %arg1: memref<16x784xbf16, #tpu.memory_space<vmem>>, %arg2: memref<784x400xbf16, #tpu.memory_space<vmem>>, %arg3: memref<1x400xf32, #tpu.memory_space<vmem>>, %arg4: memref<400x128xbf16, #tpu.memory_space<vmem>>, %arg5: memref<1x128xf32, #tpu.memory_space<vmem>>, %arg6: memref<16x128xf32, #tpu.memory_space<vmem>>) attributes {dimension_semantics = [#tpu.dimension_semantics<parallel>], iteration_bounds = array<i64: 1>, scalar_prefetch = 0 : i64, scratch_operands = 0 : i64, tpu.core_type = #tpu.core_type<tc>, window_params = [{transform_indices = @transform_0, window_bounds = array<i64: 16, 784>}, {pipeline_mode = #tpu.pipeline_mode<synchronous>, transform_indices = @transform_1, window_bounds = array<i64: 784, 400>}, {pipeline_mode = #tpu.pipeline_mode<synchronous>, transform_indices = @transform_2, window_bounds = array<i64: 1, 400>}, {pipeline_mode = #tpu.pipeline_mode<synchronous>, transform_indices = @transform_3, window_bounds = array<i64: 400, 128>}, {pipeline_mode = #tpu.pipeline_mode<synchronous>, transform_indices = @transform_4, window_bounds = array<i64: 1, 128>}, {transform_indices = @transform_5, window_bounds = array<i64: 16, 128>}]} {
    %c0 = arith.constant 0 : index
    %c0_0 = arith.constant 0 : index
    %0 = vector.load %arg1[%c0, %c0_0] : memref<16x784xbf16, #tpu.memory_space<vmem>>, vector<16x784xbf16>
    %c0_1 = arith.constant 0 : index
    %c0_2 = arith.constant 0 : index
    %1 = vector.load %arg2[%c0_1, %c0_2] : memref<784x400xbf16, #tpu.memory_space<vmem>>, vector<784x400xbf16>
    %cst = arith.constant dense<0.000000e+00> : vector<16x400xf32>
    %2 = tpu.matmul %0, %1, %cst {dimension_numbers = #tpu.dot_dimension_numbers<[1], [0], [0], [1], [0, 0, 1, 1], [], []>} : vector<16x784xbf16>, vector<784x400xbf16>, vector<16x400xf32> -> vector<16x400xf32>
    %c0_3 = arith.constant 0 : index
    %c0_4 = arith.constant 0 : index
    %3 = vector.load %arg3[%c0_3, %c0_4] : memref<1x400xf32, #tpu.memory_space<vmem>>, vector<1x400xf32>
    %4 = vector.broadcast %3 : vector<1x400xf32> to vector<16x400xf32>
    %5 = arith.addf %2, %4 : vector<16x400xf32>
    %cst_5 = arith.constant 0.000000e+00 : f32
    %6 = vector.broadcast %cst_5 : f32 to vector<16x400xf32>
    %7 = arith.maximumf %5, %6 : vector<16x400xf32>
    %8 = arith.truncf %7 : vector<16x400xf32> to vector<16x400xbf16>
    %c0_6 = arith.constant 0 : index
    %c0_7 = arith.constant 0 : index
    %9 = vector.load %arg4[%c0_6, %c0_7] : memref<400x128xbf16, #tpu.memory_space<vmem>>, vector<400x128xbf16>
    %cst_8 = arith.constant dense<0.000000e+00> : vector<16x128xf32>
    %10 = tpu.matmul %8, %9, %cst_8 {dimension_numbers = #tpu.dot_dimension_numbers<[1], [0], [0], [1], [0, 0, 1, 1], [], []>} : vector<16x400xbf16>, vector<400x128xbf16>, vector<16x128xf32> -> vector<16x128xf32>
    %c0_9 = arith.constant 0 : index
    %c0_10 = arith.constant 0 : index
    %11 = vector.load %arg5[%c0_9, %c0_10] : memref<1x128xf32, #tpu.memory_space<vmem>>, vector<1x128xf32>
    %12 = vector.broadcast %11 : vector<1x128xf32> to vector<16x128xf32>
    %13 = arith.addf %10, %12 : vector<16x128xf32>
    %14 = tpu.iota {dimensions = array<i32: 1>} : vector<16x128xi32>
    %c32_i32 = arith.constant 32 : i32
    %15 = vector.broadcast %c32_i32 : i32 to vector<16x128xi32>
    %16 = arith.cmpi slt, %14, %15 : vector<16x128xi32>
    %c32_i32_11 = arith.constant 32 : i32
    %17 = vector.broadcast %c32_i32_11 : i32 to vector<16x128xi32>
    %18 = arith.cmpi sge, %14, %17 : vector<16x128xi32>
    %c48_i32 = arith.constant 48 : i32
    %19 = vector.broadcast %c48_i32 : i32 to vector<16x128xi32>
    %20 = arith.cmpi slt, %14, %19 : vector<16x128xi32>
    %21 = arith.andi %18, %20 : vector<16x128xi1>
    %c48_i32_12 = arith.constant 48 : i32
    %22 = vector.broadcast %c48_i32_12 : i32 to vector<16x128xi32>
    %23 = arith.cmpi sge, %14, %22 : vector<16x128xi32>
    %c64_i32 = arith.constant 64 : i32
    %24 = vector.broadcast %c64_i32 : i32 to vector<16x128xi32>
    %25 = arith.cmpi slt, %14, %24 : vector<16x128xi32>
    %26 = arith.andi %23, %25 : vector<16x128xi1>
    %27 = arith.ori %21, %26 : vector<16x128xi1>
    %cst_13 = arith.constant 0xFF800000 : f32
    %28 = vector.broadcast %cst_13 : f32 to vector<16x128xf32>
    %29 = arith.select %21, %13, %28 : vector<16x128xi1>, vector<16x128xf32>
    %cst_14 = arith.constant dense<0xFF800000> : vector<16xf32>
    %30 = vector.multi_reduction <maximumf>, %29, %cst_14 [1] : vector<16x128xf32> to vector<16xf32>
    %31 = vector.shape_cast %30 : vector<16xf32> to vector<16x1xf32>
    %cst_15 = arith.constant 0xFF800000 : f32
    %32 = vector.broadcast %cst_15 : f32 to vector<16x128xf32>
    %33 = arith.select %26, %13, %32 : vector<16x128xi1>, vector<16x128xf32>
    %cst_16 = arith.constant dense<0xFF800000> : vector<16xf32>
    %34 = vector.multi_reduction <maximumf>, %33, %cst_16 [1] : vector<16x128xf32> to vector<16xf32>
    %35 = vector.shape_cast %34 : vector<16xf32> to vector<16x1xf32>
    %cst_17 = arith.constant 0.000000e+00 : f32
    %36 = vector.shape_cast %35 : vector<16x1xf32> to vector<16x1xf32>
    %37 = vector.broadcast %36 : vector<16x1xf32> to vector<16x128xf32>
    %38 = vector.broadcast %cst_17 : f32 to vector<16x128xf32>
    %39 = arith.select %26, %37, %38 : vector<16x128xi1>, vector<16x128xf32>
    %40 = vector.shape_cast %31 : vector<16x1xf32> to vector<16x1xf32>
    %41 = vector.broadcast %40 : vector<16x1xf32> to vector<16x128xf32>
    %42 = arith.select %21, %41, %39 : vector<16x128xi1>, vector<16x128xf32>
    %43 = arith.subf %13, %42 : vector<16x128xf32>
    %cst_18 = arith.constant 0.000000e+00 : f32
    %44 = vector.broadcast %cst_18 : f32 to vector<16x128xf32>
    %45 = arith.select %27, %43, %44 : vector<16x128xi1>, vector<16x128xf32>
    %46 = math.exp %45 : vector<16x128xf32>
    %cst_19 = arith.constant 0.000000e+00 : f32
    %47 = vector.broadcast %cst_19 : f32 to vector<16x128xf32>
    %48 = arith.select %21, %46, %47 : vector<16x128xi1>, vector<16x128xf32>
    %cst_20 = arith.constant dense<0.000000e+00> : vector<16xf32>
    %49 = vector.multi_reduction <add>, %48, %cst_20 [1] : vector<16x128xf32> to vector<16xf32>
    %50 = vector.shape_cast %49 : vector<16xf32> to vector<16x1xf32>
    %cst_21 = arith.constant 0.000000e+00 : f32
    %51 = vector.broadcast %cst_21 : f32 to vector<16x128xf32>
    %52 = arith.select %26, %46, %51 : vector<16x128xi1>, vector<16x128xf32>
    %cst_22 = arith.constant dense<0.000000e+00> : vector<16xf32>
    %53 = vector.multi_reduction <add>, %52, %cst_22 [1] : vector<16x128xf32> to vector<16xf32>
    %54 = vector.shape_cast %53 : vector<16xf32> to vector<16x1xf32>
    %cst_23 = arith.constant 1.000000e+00 : f32
    %55 = vector.shape_cast %54 : vector<16x1xf32> to vector<16x1xf32>
    %56 = vector.broadcast %55 : vector<16x1xf32> to vector<16x128xf32>
    %57 = vector.broadcast %cst_23 : f32 to vector<16x128xf32>
    %58 = arith.select %26, %56, %57 : vector<16x128xi1>, vector<16x128xf32>
    %59 = vector.shape_cast %50 : vector<16x1xf32> to vector<16x1xf32>
    %60 = vector.broadcast %59 : vector<16x1xf32> to vector<16x128xf32>
    %61 = arith.select %21, %60, %58 : vector<16x128xi1>, vector<16x128xf32>
    %cst_24 = arith.constant 1.600000e+01 : f32
    %cst_25 = arith.constant 0.000000e+00 : f32
    %62 = vector.broadcast %cst_24 : f32 to vector<16x128xf32>
    %63 = vector.broadcast %cst_25 : f32 to vector<16x128xf32>
    %64 = arith.select %26, %62, %63 : vector<16x128xi1>, vector<16x128xf32>
    %cst_26 = arith.constant 1.600000e+01 : f32
    %65 = vector.broadcast %cst_26 : f32 to vector<16x128xf32>
    %66 = arith.select %21, %65, %64 : vector<16x128xi1>, vector<16x128xf32>
    %67 = arith.mulf %46, %66 : vector<16x128xf32>
    %68 = arith.divf %67, %61 : vector<16x128xf32>
    %cst_27 = arith.constant 9.99999997E-7 : f32
    %69 = vector.broadcast %cst_27 : f32 to vector<16x128xf32>
    %70 = arith.addf %68, %69 : vector<16x128xf32>
    %cst_28 = arith.constant 0.000000e+00 : f32
    %71 = vector.broadcast %cst_28 : f32 to vector<16x128xf32>
    %72 = arith.select %27, %70, %71 : vector<16x128xi1>, vector<16x128xf32>
    %73 = arith.select %16, %13, %72 : vector<16x128xi1>, vector<16x128xf32>
    %c0_29 = arith.constant 0 : index
    %c0_30 = arith.constant 0 : index
    %74 = vector.load %arg6[%c0_29, %c0_30] : memref<16x128xf32, #tpu.memory_space<vmem>>, vector<16x128xf32>
    tpu.vector_store %arg6[%c0_29, %c0_30], %73 {strides = array<i32>} : memref<16x128xf32, #tpu.memory_space<vmem>>, vector<16x128xf32>,
    return
  }
  func.func @transform_0(%arg0: i32) -> (i32, i32) {
    %c0_i32 = arith.constant 0 : i32
    %c0_i32_0 = arith.constant 0 : i32
    return %arg0, %c0_i32 : i32, i32
  }
  func.func @transform_1(%arg0: i32) -> (i32, i32) {
    %c0_i32 = arith.constant 0 : i32
    %c0_i32_0 = arith.constant 0 : i32
    %c0_i32_1 = arith.constant 0 : i32
    return %c0_i32, %c0_i32_0 : i32, i32
  }
  func.func @transform_2(%arg0: i32) -> (i32, i32) {
    %c0_i32 = arith.constant 0 : i32
    %c0_i32_0 = arith.constant 0 : i32
    %c0_i32_1 = arith.constant 0 : i32
    return %c0_i32, %c0_i32_0 : i32, i32
  }
  func.func @transform_3(%arg0: i32) -> (i32, i32) {
    %c0_i32 = arith.constant 0 : i32
    %c0_i32_0 = arith.constant 0 : i32
    %c0_i32_1 = arith.constant 0 : i32
    return %c0_i32, %c0_i32_0 : i32, i32
  }
  func.func @transform_4(%arg0: i32) -> (i32, i32) {
    %c0_i32 = arith.constant 0 : i32
    %c0_i32_0 = arith.constant 0 : i32
    %c0_i32_1 = arith.constant 0 : i32
    return %c0_i32, %c0_i32_0 : i32, i32
  }
  func.func @transform_5(%arg0: i32) -> (i32, i32) {
    %c0_i32 = arith.constant 0 : i32
    %c0_i32_0 = arith.constant 0 : i32
    return %arg0, %c0_i32 : i32, i32
  }
}

</mosaic_0001>

<llo_original>
// kernel: mnist_encoder_plus.1
$region0: #{mnist_encoder_plus.1}
  #allocation0 [shape = 'u32[]', space=smem, size = 0x4, offset = 0x4, fixed_abs, tag = 'smem constant byte address 0x4 - core index']
  #allocation1 [shape = 'u32[144,128]{1,0:T(1,128)}', space=vmem, size = 0x12000, scoped, tag = 'internal scratch']
  %s0 = inlined_call_operand.vmem [shape: bf16[16,784], index: 0, kind: input, shape index: {}]
  %s1 = inlined_call_operand.vmem [shape: bf16[784,400], index: 1, kind: input, shape index: {}]
  %s2 = inlined_call_operand.vmem [shape: f32[1,400], index: 2, kind: input, shape index: {}]
  %s3 = inlined_call_operand.vmem [shape: bf16[400,128], index: 3, kind: input, shape index: {}]
  %s4 = inlined_call_operand.vmem [shape: f32[1,128], index: 4, kind: input, shape index: {}]
  %s5 = inlined_call_operand.vmem [shape: f32[16,128], index: 5, kind: output, shape index: {}]
  %s6 = sld [smem:[#allocation0]]
  $region30: #{mnist_encoder_plus.1} parent=0
    _
  %s8 = ssub.s32 1, %s6
  %s9 = scalar_select 0, %s8, %s6
  // Predicated region
  $region2: #{mnist_encoder_plus.1} parent=0 // pred_check
    _
  $region3: #{mnist_encoder_plus.1} parent=0 // pred_check_branch
    %11 = sbr.rel (0) target = $region5
  $region4: #{mnist_encoder_plus.1} parent=0 // pred_region
    _
  $region5: #{mnist_encoder_plus.1} parent=0 // pred_fallthru
    _
  // Predicated region
  $region6: #{mnist_encoder_plus.1} parent=0 // pred_check
    _
  $region7: #{mnist_encoder_plus.1} parent=0 // pred_check_branch
    %13 = sbr.rel (0) target = $region9
  $region8: #{mnist_encoder_plus.1} parent=0 // pred_region
    _
  $region9: #{mnist_encoder_plus.1} parent=0 // pred_fallthru
    _
  // Predicated region
  $region10: #{mnist_encoder_plus.1} parent=0 // pred_check
    _
  $region11: #{mnist_encoder_plus.1} parent=0 // pred_check_branch
    %15 = sbr.rel (0) target = $region13
  $region12: #{mnist_encoder_plus.1} parent=0 // pred_region
    _
  $region13: #{mnist_encoder_plus.1} parent=0 // pred_fallthru
    _
  // Predicated region
  $region14: #{mnist_encoder_plus.1} parent=0 // pred_check
    _
  $region15: #{mnist_encoder_plus.1} parent=0 // pred_check_branch
    %17 = sbr.rel (0) target = $region17
  $region16: #{mnist_encoder_plus.1} parent=0 // pred_region
    _
  $region17: #{mnist_encoder_plus.1} parent=0 // pred_fallthru
    _
  // Predicated region
  $region18: #{mnist_encoder_plus.1} parent=0 // pred_check
    _
  $region19: #{mnist_encoder_plus.1} parent=0 // pred_check_branch
    %19 = sbr.rel (0) target = $region21
  $region20: #{mnist_encoder_plus.1} parent=0 // pred_region
    _
  $region21: #{mnist_encoder_plus.1} parent=0 // pred_fallthru
    _
  %v21 = vld [vmem:[%s0] sm:$0xff]
  %v22 = vld [vmem:[%s0 + $0x8] sm:$0xff]
  %v23 = vld [vmem:[%s0 + $0x10] sm:$0xff]
  %v24 = vld [vmem:[%s0 + $0x18] sm:$0xf]
  %v25 = vld [vmem:[%s0 + $0x1c] sm:$0xff]
  %v26 = vld [vmem:[%s0 + $0x24] sm:$0xff]
  %v27 = vld [vmem:[%s0 + $0x2c] sm:$0xff]
  %v28 = vld [vmem:[%s0 + $0x34] sm:$0xf]
  %v29 = vld [vmem:[%s1] sm:$0xff]
  %v30 = vld [vmem:[%s1 + $0x8] sm:$0xff]
  %v31 = vld [vmem:[%s1 + $0x10] sm:$0xff]
  %v32 = vld [vmem:[%s1 + $0x18] sm:$0xff]
  %v33 = vld [vmem:[%s1 + $0x20] sm:$0xff]
  %v34 = vld [vmem:[%s1 + $0x28] sm:$0xff]
  %v35 = vld [vmem:[%s1 + $0x30] sm:$0xff]
  %v36 = vld [vmem:[%s1 + $0x38] sm:$0xff]
  %v37 = vld [vmem:[%s1 + $0x40] sm:$0xff]
  %v38 = vld [vmem:[%s1 + $0x48] sm:$0xff]
  %v39 = vld [vmem:[%s1 + $0x50] sm:$0xff]
  %v40 = vld [vmem:[%s1 + $0x58] sm:$0xff]
  %v41 = vld [vmem:[%s1 + $0x60] sm:$0xff]
  %v42 = vld [vmem:[%s1 + $0x68] sm:$0xff]
  %v43 = vld [vmem:[%s1 + $0x70] sm:$0xff]
  %v44 = vld [vmem:[%s1 + $0x78] sm:$0xff]
  %v45 = vld [vmem:[%s1 + $0x80] sm:$0xff]
  %v46 = vld [vmem:[%s1 + $0x88] sm:$0xff]
  %v47 = vld [vmem:[%s1 + $0x90] sm:$0xff]
  %v48 = vld [vmem:[%s1 + $0x98] sm:$0xff]
  %v49 = vld [vmem:[%s1 + $0xa0] sm:$0xff]
  %v50 = vld [vmem:[%s1 + $0xa8] sm:$0xff]
  %v51 = vld [vmem:[%s1 + $0xb0] sm:$0xff]
  %v52 = vld [vmem:[%s1 + $0xb8] sm:$0xff]
  %v53 = vld [vmem:[%s1 + $0xc0] sm:$0xff]
  %v54 = vld [vmem:[%s1 + $0xc8] sm:$0xff]
  %v55 = vld [vmem:[%s1 + $0xd0] sm:$0xff]
  %v56 = vld [vmem:[%s1 + $0xd8] sm:$0xff]
  %v57 = vld [vmem:[%s1 + $0xe0] sm:$0xff]
  %v58 = vld [vmem:[%s1 + $0xe8] sm:$0xff]
  %v59 = vld [vmem:[%s1 + $0xf0] sm:$0xff]
  %v60 = vld [vmem:[%s1 + $0xf8] sm:$0xff]
  %v61 = vld [vmem:[%s1 + $0x100] sm:$0xff]
  %v62 = vld [vmem:[%s1 + $0x108] sm:$0xff]
  %v63 = vld [vmem:[%s1 + $0x110] sm:$0xff]
  %v64 = vld [vmem:[%s1 + $0x118] sm:$0xff]
  %v65 = vld [vmem:[%s1 + $0x120] sm:$0xff]
  %v66 = vld [vmem:[%s1 + $0x128] sm:$0xff]
  %v67 = vld [vmem:[%s1 + $0x130] sm:$0xff]
  %v68 = vld [vmem:[%s1 + $0x138] sm:$0xff]
  %v69 = vld [vmem:[%s1 + $0x140] sm:$0xff]
  %v70 = vld [vmem:[%s1 + $0x148] sm:$0xff]
  %v71 = vld [vmem:[%s1 + $0x150] sm:$0xff]
  %v72 = vld [vmem:[%s1 + $0x158] sm:$0xff]
  %v73 = vld [vmem:[%s1 + $0x160] sm:$0xff]
  %v74 = vld [vmem:[%s1 + $0x168] sm:$0xff]
  %v75 = vld [vmem:[%s1 + $0x170] sm:$0xff]
  %v76 = vld [vmem:[%s1 + $0x178] sm:$0xff]
  %v77 = vld [vmem:[%s1 + $0x180] sm:$0xff]
  %v78 = vld [vmem:[%s1 + $0x188] sm:$0xff]
  %v79 = vld [vmem:[%s1 + $0x190] sm:$0xff]
  %v80 = vld [vmem:[%s1 + $0x198] sm:$0xff]
  %v81 = vld [vmem:[%s1 + $0x1a0] sm:$0xff]
  %v82 = vld [vmem:[%s1 + $0x1a8] sm:$0xff]
  %v83 = vld [vmem:[%s1 + $0x1b0] sm:$0xff]
  %v84 = vld [vmem:[%s1 + $0x1b8] sm:$0xff]
  %v85 = vld [vmem:[%s1 + $0x1c0] sm:$0xff]
  %v86 = vld [vmem:[%s1 + $0x1c8] sm:$0xff]
  %v87 = vld [vmem:[%s1 + $0x1d0] sm:$0xff]
  %v88 = vld [vmem:[%s1 + $0x1d8] sm:$0xff]
  %v89 = vld [vmem:[%s1 + $0x1e0] sm:$0xff]
  %v90 = vld [vmem:[%s1 + $0x1e8] sm:$0xff]
  %v91 = vld [vmem:[%s1 + $0x1f0] sm:$0xff]
  %v92 = vld [vmem:[%s1 + $0x1f8] sm:$0xff]
  %v93 = vld [vmem:[%s1 + $0x200] sm:$0xff]
  %v94 = vld [vmem:[%s1 + $0x208] sm:$0xff]
  %v95 = vld [vmem:[%s1 + $0x210] sm:$0xff]
  %v96 = vld [vmem:[%s1 + $0x218] sm:$0xff]
  %v97 = vld [vmem:[%s1 + $0x220] sm:$0xff]
  %v98 = vld [vmem:[%s1 + $0x228] sm:$0xff]
  %v99 = vld [vmem:[%s1 + $0x230] sm:$0xff]
  %v100 = vld [vmem:[%s1 + $0x238] sm:$0xff]
  %v101 = vld [vmem:[%s1 + $0x240] sm:$0xff]
  %v102 = vld [vmem:[%s1 + $0x248] sm:$0xff]
  %v103 = vld [vmem:[%s1 + $0x250] sm:$0xff]
  %v104 = vld [vmem:[%s1 + $0x258] sm:$0xff]
  %v105 = vld [vmem:[%s1 + $0x260] sm:$0xff]
  %v106 = vld [vmem:[%s1 + $0x268] sm:$0xff]
  %v107 = vld [vmem:[%s1 + $0x270] sm:$0xff]
  %v108 = vld [vmem:[%s1 + $0x278] sm:$0xff]
  %v109 = vld [vmem:[%s1 + $0x280] sm:$0xff]
  %v110 = vld [vmem:[%s1 + $0x288] sm:$0xff]
  %v111 = vld [vmem:[%s1 + $0x290] sm:$0xff]
  %v112 = vld [vmem:[%s1 + $0x298] sm:$0xff]
  %v113 = vld [vmem:[%s1 + $0x2a0] sm:$0xff]
  %v114 = vld [vmem:[%s1 + $0x2a8] sm:$0xff]
  %v115 = vld [vmem:[%s1 + $0x2b0] sm:$0xff]
  %v116 = vld [vmem:[%s1 + $0x2b8] sm:$0xff]
  %v117 = vld [vmem:[%s1 + $0x2c0] sm:$0xff]
  %v118 = vld [vmem:[%s1 + $0x2c8] sm:$0xff]
  %v119 = vld [vmem:[%s1 + $0x2d0] sm:$0xff]
  %v120 = vld [vmem:[%s1 + $0x2d8] sm:$0xff]
  %v121 = vld [vmem:[%s1 + $0x2e0] sm:$0xff]
  %v122 = vld [vmem:[%s1 + $0x2e8] sm:$0xff]
  %v123 = vld [vmem:[%s1 + $0x2f0] sm:$0xff]
  %v124 = vld [vmem:[%s1 + $0x2f8] sm:$0xff]
  %v125 = vld [vmem:[%s1 + $0x300] sm:$0xff]
  %v126 = vld [vmem:[%s1 + $0x308] sm:$0xff]
  %v127 = vld [vmem:[%s1 + $0x310] sm:$0xff]
  %v128 = vld [vmem:[%s1 + $0x318] sm:$0xff]
  %v129 = vld [vmem:[%s1 + $0x320] sm:$0xff]
  %v130 = vld [vmem:[%s1 + $0x328] sm:$0xff]
  %v131 = vld [vmem:[%s1 + $0x330] sm:$0xff]
  %v132 = vld [vmem:[%s1 + $0x338] sm:$0xff]
  %v133 = vld [vmem:[%s1 + $0x340] sm:$0xff]
  %v134 = vld [vmem:[%s1 + $0x348] sm:$0xff]
  %v135 = vld [vmem:[%s1 + $0x350] sm:$0xff]
  %v136 = vld [vmem:[%s1 + $0x358] sm:$0xff]
  %v137 = vld [vmem:[%s1 + $0x360] sm:$0xff]
  %v138 = vld [vmem:[%s1 + $0x368] sm:$0xff]
  %v139 = vld [vmem:[%s1 + $0x370] sm:$0xff]
  %v140 = vld [vmem:[%s1 + $0x378] sm:$0xff]
  %v141 = vld [vmem:[%s1 + $0x380] sm:$0xff]
  %v142 = vld [vmem:[%s1 + $0x388] sm:$0xff]
  %v143 = vld [vmem:[%s1 + $0x390] sm:$0xff]
  %v144 = vld [vmem:[%s1 + $0x398] sm:$0xff]
  %v145 = vld [vmem:[%s1 + $0x3a0] sm:$0xff]
  %v146 = vld [vmem:[%s1 + $0x3a8] sm:$0xff]
  %v147 = vld [vmem:[%s1 + $0x3b0] sm:$0xff]
  %v148 = vld [vmem:[%s1 + $0x3b8] sm:$0xff]
  %v149 = vld [vmem:[%s1 + $0x3c0] sm:$0xff]
  %v150 = vld [vmem:[%s1 + $0x3c8] sm:$0xff]
  %v151 = vld [vmem:[%s1 + $0x3d0] sm:$0xff]
  %v152 = vld [vmem:[%s1 + $0x3d8] sm:$0xff]
  %v153 = vld [vmem:[%s1 + $0x3e0] sm:$0xff]
  %v154 = vld [vmem:[%s1 + $0x3e8] sm:$0xff]
  %v155 = vld [vmem:[%s1 + $0x3f0] sm:$0xff]
  %v156 = vld [vmem:[%s1 + $0x3f8] sm:$0xff]
  %v157 = vld [vmem:[%s1 + $0x400] sm:$0xff]
  %v158 = vld [vmem:[%s1 + $0x408] sm:$0xff]
  %v159 = vld [vmem:[%s1 + $0x410] sm:$0xff]
  %v160 = vld [vmem:[%s1 + $0x418] sm:$0xff]
  %v161 = vld [vmem:[%s1 + $0x420] sm:$0xff]
  %v162 = vld [vmem:[%s1 + $0x428] sm:$0xff]
  %v163 = vld [vmem:[%s1 + $0x430] sm:$0xff]
  %v164 = vld [vmem:[%s1 + $0x438] sm:$0xff]
  %v165 = vld [vmem:[%s1 + $0x440] sm:$0xff]
  %v166 = vld [vmem:[%s1 + $0x448] sm:$0xff]
  %v167 = vld [vmem:[%s1 + $0x450] sm:$0xff]
  %v168 = vld [vmem:[%s1 + $0x458] sm:$0xff]
  %v169 = vld [vmem:[%s1 + $0x460] sm:$0xff]
  %v170 = vld [vmem:[%s1 + $0x468] sm:$0xff]
  %v171 = vld [vmem:[%s1 + $0x470] sm:$0xff]
  %v172 = vld [vmem:[%s1 + $0x478] sm:$0xff]
  %v173 = vld [vmem:[%s1 + $0x480] sm:$0xff]
  %v174 = vld [vmem:[%s1 + $0x488] sm:$0xff]
  %v175 = vld [vmem:[%s1 + $0x490] sm:$0xff]
  %v176 = vld [vmem:[%s1 + $0x498] sm:$0xff]
  %v177 = vld [vmem:[%s1 + $0x4a0] sm:$0xff]
  %v178 = vld [vmem:[%s1 + $0x4a8] sm:$0xff]
  %v179 = vld [vmem:[%s1 + $0x4b0] sm:$0xff]
  %v180 = vld [vmem:[%s1 + $0x4b8] sm:$0xff]
  %v181 = vld [vmem:[%s1 + $0x4c0] sm:$0xff]
  %v182 = vld [vmem:[%s1 + $0x4c8] sm:$0xff]
  %v183 = vld [vmem:[%s1 + $0x4d0] sm:$0xff]
  %v184 = vld [vmem:[%s1 + $0x4d8] sm:$0xff]
  %v185 = vld [vmem:[%s1 + $0x4e0] sm:$0xff]
  %v186 = vld [vmem:[%s1 + $0x4e8] sm:$0xff]
  %v187 = vld [vmem:[%s1 + $0x4f0] sm:$0xff]
  %v188 = vld [vmem:[%s1 + $0x4f8] sm:$0xff]
  %v189 = vld [vmem:[%s1 + $0x500] sm:$0xff]
  %v190 = vld [vmem:[%s1 + $0x508] sm:$0xff]
  %v191 = vld [vmem:[%s1 + $0x510] sm:$0xff]
  %v192 = vld [vmem:[%s1 + $0x518] sm:$0xff]
  %v193 = vld [vmem:[%s1 + $0x520] sm:$0xff]
  %v194 = vld [vmem:[%s1 + $0x528] sm:$0xff]
  %v195 = vld [vmem:[%s1 + $0x530] sm:$0xff]
  %v196 = vld [vmem:[%s1 + $0x538] sm:$0xff]
  %v197 = vld [vmem:[%s1 + $0x540] sm:$0xff]
  %v198 = vld [vmem:[%s1 + $0x548] sm:$0xff]
  %v199 = vld [vmem:[%s1 + $0x550] sm:$0xff]
  %v200 = vld [vmem:[%s1 + $0x558] sm:$0xff]
  %v201 = vld [vmem:[%s1 + $0x560] sm:$0xff]
  %v202 = vld [vmem:[%s1 + $0x568] sm:$0xff]
  %v203 = vld [vmem:[%s1 + $0x570] sm:$0xff]
  %v204 = vld [vmem:[%s1 + $0x578] sm:$0xff]
  %v205 = vld [vmem:[%s1 + $0x580] sm:$0xff]
  %v206 = vld [vmem:[%s1 + $0x588] sm:$0xff]
  %v207 = vld [vmem:[%s1 + $0x590] sm:$0xff]
  %v208 = vld [vmem:[%s1 + $0x598] sm:$0xff]
  %v209 = vld [vmem:[%s1 + $0x5a0] sm:$0xff]
  %v210 = vld [vmem:[%s1 + $0x5a8] sm:$0xff]
  %v211 = vld [vmem:[%s1 + $0x5b0] sm:$0xff]
  %v212 = vld [vmem:[%s1 + $0x5b8] sm:$0xff]
  %v213 = vld [vmem:[%s1 + $0x5c0] sm:$0xff]
  %v214 = vld [vmem:[%s1 + $0x5c8] sm:$0xff]
  %v215 = vld [vmem:[%s1 + $0x5d0] sm:$0xff]
  %v216 = vld [vmem:[%s1 + $0x5d8] sm:$0xff]
  %v217 = vld [vmem:[%s1 + $0x5e0] sm:$0xff]
  %v218 = vld [vmem:[%s1 + $0x5e8] sm:$0xff]
  %v219 = vld [vmem:[%s1 + $0x5f0] sm:$0xff]
  %v220 = vld [vmem:[%s1 + $0x5f8] sm:$0xff]
  %v221 = vld [vmem:[%s1 + $0x600] sm:$0xff]
  %v222 = vld [vmem:[%s1 + $0x608] sm:$0xff]
  %v223 = vld [vmem:[%s1 + $0x610] sm:$0xff]
  %v224 = vld [vmem:[%s1 + $0x618] sm:$0xff]
  %v225 = vld [vmem:[%s2] sm:$0xf]
  %v227 = vlaneseq
  %v228 = vshrl.u32 %v227, 7
  %v229 = vsub.s32 0, %v228
  %v230 = vrot.slane %v225, %v229
  %v231 = vlaneseq
  %v232 = vshrl.u32 %v231, 7
  %v233 = vsub.s32 1, %v232
  %v234 = vrot.slane %v225, %v233
  %v235 = vlaneseq
  %v236 = vshrl.u32 %v235, 7
  %v237 = vsub.s32 2, %v236
  %v238 = vrot.slane %v225, %v237
  %v239 = vlaneseq
  %v240 = vshrl.u32 %v239, 7
  %v241 = vsub.s32 3, %v240
  %v242 = vrot.slane %v225, %v241
  %v255 = vunpack.c.l.b16 %v21
  %v256 = vunpack.c.h.b16 %v21
  %v257 = vunpack.c.l.b16 %v22
  %v258 = vunpack.c.h.b16 %v22
  %v259 = vunpack.c.l.b16 %v23
  %v260 = vunpack.c.h.b16 %v23
  %v261 = vunpack.c.l.b16 %v24
  %v262 = vunpack.c.l.b16 %v25
  %v263 = vunpack.c.h.b16 %v25
  %v264 = vunpack.c.l.b16 %v26
  %v265 = vunpack.c.h.b16 %v26
  %v266 = vunpack.c.l.b16 %v27
  %v267 = vunpack.c.h.b16 %v27
  %v268 = vunpack.c.l.b16 %v28
  %v269 = vpack.c.b16 %v262, %v255
  %v270 = vpack.c.b16 %v263, %v256
  %v271 = vpack.c.b16 %v264, %v257
  %v272 = vpack.c.b16 %v265, %v258
  %v273 = vpack.c.b16 %v266, %v259
  %v274 = vpack.c.b16 %v267, %v260
  %v275 = vpack.c.b16 %v268, %v261
  %v478 = vunpack.c.l.b16 %v29
  %v479 = vunpack.c.h.b16 %v29
  %v480 = vunpack.c.l.b16 %v30
  %v481 = vunpack.c.h.b16 %v30
  %v482 = vunpack.c.l.b16 %v31
  %v483 = vunpack.c.h.b16 %v31
  %v484 = vunpack.c.l.b16 %v32
  %v485 = vunpack.c.h.b16 %v32
  %v486 = vunpack.c.l.b16 %v33
  %v487 = vunpack.c.h.b16 %v33
  %v488 = vunpack.c.l.b16 %v34
  %v489 = vunpack.c.h.b16 %v34
  %v490 = vunpack.c.l.b16 %v35
  %v491 = vunpack.c.h.b16 %v35
  %v492 = vunpack.c.l.b16 %v36
  %v493 = vunpack.c.h.b16 %v36
  %v494 = vunpack.c.l.b16 %v37
  %v495 = vunpack.c.h.b16 %v37
  %v496 = vunpack.c.l.b16 %v38
  %v497 = vunpack.c.h.b16 %v38
  %v498 = vunpack.c.l.b16 %v39
  %v499 = vunpack.c.h.b16 %v39
  %v500 = vunpack.c.l.b16 %v40
  %v501 = vunpack.c.h.b16 %v40
  %v502 = vunpack.c.l.b16 %v41
  %v503 = vunpack.c.h.b16 %v41
  %v504 = vunpack.c.l.b16 %v42
  %v505 = vunpack.c.h.b16 %v42
  %v506 = vunpack.c.l.b16 %v43
  %v507 = vunpack.c.h.b16 %v43
  %v508 = vunpack.c.l.b16 %v44
  %v509 = vunpack.c.h.b16 %v44
  %v510 = vunpack.c.l.b16 %v45
  %v511 = vunpack.c.h.b16 %v45
  %v512 = vunpack.c.l.b16 %v46
  %v513 = vunpack.c.h.b16 %v46
  %v514 = vunpack.c.l.b16 %v47
  %v515 = vunpack.c.h.b16 %v47
  %v516 = vunpack.c.l.b16 %v48
  %v517 = vunpack.c.h.b16 %v48
  %v518 = vunpack.c.l.b16 %v49
  %v519 = vunpack.c.h.b16 %v49
  %v520 = vunpack.c.l.b16 %v50
  %v521 = vunpack.c.h.b16 %v50
  %v522 = vunpack.c.l.b16 %v51
  %v523 = vunpack.c.h.b16 %v51
  %v524 = vunpack.c.l.b16 %v52
  %v525 = vunpack.c.h.b16 %v52
  %v526 = vunpack.c.l.b16 %v53
  %v527 = vunpack.c.h.b16 %v53
  %v528 = vunpack.c.l.b16 %v54
  %v529 = vunpack.c.h.b16 %v54
  %v530 = vunpack.c.l.b16 %v55
  %v531 = vunpack.c.h.b16 %v55
  %v532 = vunpack.c.l.b16 %v56
  %v533 = vunpack.c.h.b16 %v56
  %v534 = vunpack.c.l.b16 %v57
  %v535 = vunpack.c.h.b16 %v57
  %v536 = vunpack.c.l.b16 %v58
  %v537 = vunpack.c.h.b16 %v58
  %v538 = vunpack.c.l.b16 %v59
  %v539 = vunpack.c.h.b16 %v59
  %v540 = vunpack.c.l.b16 %v60
  %v541 = vunpack.c.h.b16 %v60
  %v542 = vunpack.c.l.b16 %v61
  %v543 = vunpack.c.h.b16 %v61
  %v544 = vunpack.c.l.b16 %v62
  %v545 = vunpack.c.h.b16 %v62
  %v546 = vunpack.c.l.b16 %v63
  %v547 = vunpack.c.h.b16 %v63
  %v548 = vunpack.c.l.b16 %v64
  %v549 = vunpack.c.h.b16 %v64
  %v550 = vunpack.c.l.b16 %v65
  %v551 = vunpack.c.h.b16 %v65
  %v552 = vunpack.c.l.b16 %v66
  %v553 = vunpack.c.h.b16 %v66
  %v554 = vunpack.c.l.b16 %v67
  %v555 = vunpack.c.h.b16 %v67
  %v556 = vunpack.c.l.b16 %v68
  %v557 = vunpack.c.h.b16 %v68
  %v558 = vunpack.c.l.b16 %v69
  %v559 = vunpack.c.h.b16 %v69
  %v560 = vunpack.c.l.b16 %v70
  %v561 = vunpack.c.h.b16 %v70
  %v562 = vunpack.c.l.b16 %v71
  %v563 = vunpack.c.h.b16 %v71
  %v564 = vunpack.c.l.b16 %v72
  %v565 = vunpack.c.h.b16 %v72
  %v566 = vunpack.c.l.b16 %v73
  %v567 = vunpack.c.h.b16 %v73
  %v568 = vunpack.c.l.b16 %v74
  %v569 = vunpack.c.h.b16 %v74
  %v570 = vunpack.c.l.b16 %v75
  %v571 = vunpack.c.h.b16 %v75
  %v572 = vunpack.c.l.b16 %v76
  %v573 = vunpack.c.h.b16 %v76
  %v574 = vunpack.c.l.b16 %v77
  %v575 = vunpack.c.h.b16 %v77
  %v576 = vunpack.c.l.b16 %v78
  %v577 = vunpack.c.h.b16 %v78
  %v578 = vunpack.c.l.b16 %v79
  %v579 = vunpack.c.h.b16 %v79
  %v580 = vunpack.c.l.b16 %v80
  %v581 = vunpack.c.h.b16 %v80
  %v582 = vunpack.c.l.b16 %v81
  %v583 = vunpack.c.h.b16 %v81
  %v584 = vunpack.c.l.b16 %v82
  %v585 = vunpack.c.h.b16 %v82
  %v586 = vunpack.c.l.b16 %v83
  %v587 = vunpack.c.h.b16 %v83
  %v588 = vunpack.c.l.b16 %v84
  %v589 = vunpack.c.h.b16 %v84
  %v590 = vunpack.c.l.b16 %v85
  %v591 = vunpack.c.h.b16 %v85
  %v592 = vunpack.c.l.b16 %v86
  %v593 = vunpack.c.h.b16 %v86
  %v594 = vunpack.c.l.b16 %v87
  %v595 = vunpack.c.h.b16 %v87
  %v596 = vunpack.c.l.b16 %v88
  %v597 = vunpack.c.h.b16 %v88
  %v598 = vunpack.c.l.b16 %v89
  %v599 = vunpack.c.h.b16 %v89
  %v600 = vunpack.c.l.b16 %v90
  %v601 = vunpack.c.h.b16 %v90
  %v602 = vunpack.c.l.b16 %v91
  %v603 = vunpack.c.h.b16 %v91
  %v604 = vunpack.c.l.b16 %v92
  %v605 = vunpack.c.h.b16 %v92
  %v606 = vunpack.c.l.b16 %v93
  %v607 = vunpack.c.h.b16 %v93
  %v608 = vunpack.c.l.b16 %v94
  %v609 = vunpack.c.h.b16 %v94
  %v610 = vunpack.c.l.b16 %v95
  %v611 = vunpack.c.h.b16 %v95
  %v612 = vunpack.c.l.b16 %v96
  %v613 = vunpack.c.h.b16 %v96
  %v614 = vunpack.c.l.b16 %v97
  %v615 = vunpack.c.h.b16 %v97
  %v616 = vunpack.c.l.b16 %v98
  %v617 = vunpack.c.h.b16 %v98
  %v618 = vunpack.c.l.b16 %v99
  %v619 = vunpack.c.h.b16 %v99
  %v620 = vunpack.c.l.b16 %v100
  %v621 = vunpack.c.h.b16 %v100
  %v622 = vunpack.c.l.b16 %v101
  %v623 = vunpack.c.h.b16 %v101
  %v624 = vunpack.c.l.b16 %v102
  %v625 = vunpack.c.h.b16 %v102
  %v626 = vunpack.c.l.b16 %v103
  %v627 = vunpack.c.h.b16 %v103
  %v628 = vunpack.c.l.b16 %v104
  %v629 = vunpack.c.h.b16 %v104
  %v630 = vunpack.c.l.b16 %v105
  %v631 = vunpack.c.h.b16 %v105
  %v632 = vunpack.c.l.b16 %v106
  %v633 = vunpack.c.h.b16 %v106
  %v634 = vunpack.c.l.b16 %v107
  %v635 = vunpack.c.h.b16 %v107
  %v636 = vunpack.c.l.b16 %v108
  %v637 = vunpack.c.h.b16 %v108
  %v638 = vunpack.c.l.b16 %v109
  %v639 = vunpack.c.h.b16 %v109
  %v640 = vunpack.c.l.b16 %v110
  %v641 = vunpack.c.h.b16 %v110
  %v642 = vunpack.c.l.b16 %v111
  %v643 = vunpack.c.h.b16 %v111
  %v644 = vunpack.c.l.b16 %v112
  %v645 = vunpack.c.h.b16 %v112
  %v646 = vunpack.c.l.b16 %v113
  %v647 = vunpack.c.h.b16 %v113
  %v648 = vunpack.c.l.b16 %v114
  %v649 = vunpack.c.h.b16 %v114
  %v650 = vunpack.c.l.b16 %v115
  %v651 = vunpack.c.h.b16 %v115
  %v652 = vunpack.c.l.b16 %v116
  %v653 = vunpack.c.h.b16 %v116
  %v654 = vunpack.c.l.b16 %v117
  %v655 = vunpack.c.h.b16 %v117
  %v656 = vunpack.c.l.b16 %v118
  %v657 = vunpack.c.h.b16 %v118
  %v658 = vunpack.c.l.b16 %v119
  %v659 = vunpack.c.h.b16 %v119
  %v660 = vunpack.c.l.b16 %v120
  %v661 = vunpack.c.h.b16 %v120
  %v662 = vunpack.c.l.b16 %v121
  %v663 = vunpack.c.h.b16 %v121
  %v664 = vunpack.c.l.b16 %v122
  %v665 = vunpack.c.h.b16 %v122
  %v666 = vunpack.c.l.b16 %v123
  %v667 = vunpack.c.h.b16 %v123
  %v668 = vunpack.c.l.b16 %v124
  %v669 = vunpack.c.h.b16 %v124
  %v670 = vunpack.c.l.b16 %v125
  %v671 = vunpack.c.h.b16 %v125
  %v672 = vunpack.c.l.b16 %v126
  %v673 = vunpack.c.h.b16 %v126
  %v674 = vunpack.c.l.b16 %v127
  %v675 = vunpack.c.h.b16 %v127
  %v676 = vunpack.c.l.b16 %v128
  %v677 = vunpack.c.h.b16 %v128
  %v678 = vunpack.c.l.b16 %v129
  %v679 = vunpack.c.h.b16 %v129
  %v680 = vunpack.c.l.b16 %v130
  %v681 = vunpack.c.h.b16 %v130
  %v682 = vunpack.c.l.b16 %v131
  %v683 = vunpack.c.h.b16 %v131
  %v684 = vunpack.c.l.b16 %v132
  %v685 = vunpack.c.h.b16 %v132
  %v686 = vunpack.c.l.b16 %v133
  %v687 = vunpack.c.h.b16 %v133
  %v688 = vunpack.c.l.b16 %v134
  %v689 = vunpack.c.h.b16 %v134
  %v690 = vunpack.c.l.b16 %v135
  %v691 = vunpack.c.h.b16 %v135
  %v692 = vunpack.c.l.b16 %v136
  %v693 = vunpack.c.h.b16 %v136
  %v694 = vunpack.c.l.b16 %v137
  %v695 = vunpack.c.h.b16 %v137
  %v696 = vunpack.c.l.b16 %v138
  %v697 = vunpack.c.h.b16 %v138
  %v698 = vunpack.c.l.b16 %v139
  %v699 = vunpack.c.h.b16 %v139
  %v700 = vunpack.c.l.b16 %v140
  %v701 = vunpack.c.h.b16 %v140
  %v702 = vunpack.c.l.b16 %v141
  %v703 = vunpack.c.h.b16 %v141
  %v704 = vunpack.c.l.b16 %v142
  %v705 = vunpack.c.h.b16 %v142
  %v706 = vunpack.c.l.b16 %v143
  %v707 = vunpack.c.h.b16 %v143
  %v708 = vunpack.c.l.b16 %v144
  %v709 = vunpack.c.h.b16 %v144
  %v710 = vunpack.c.l.b16 %v145
  %v711 = vunpack.c.h.b16 %v145
  %v712 = vunpack.c.l.b16 %v146
  %v713 = vunpack.c.h.b16 %v146
  %v714 = vunpack.c.l.b16 %v147
  %v715 = vunpack.c.h.b16 %v147
  %v716 = vunpack.c.l.b16 %v148
  %v717 = vunpack.c.h.b16 %v148
  %v718 = vunpack.c.l.b16 %v149
  %v719 = vunpack.c.h.b16 %v149
  %v720 = vunpack.c.l.b16 %v150
  %v721 = vunpack.c.h.b16 %v150
  %v722 = vunpack.c.l.b16 %v151
  %v723 = vunpack.c.h.b16 %v151
  %v724 = vunpack.c.l.b16 %v152
  %v725 = vunpack.c.h.b16 %v152
  %v726 = vunpack.c.l.b16 %v153
  %v727 = vunpack.c.h.b16 %v153
  %v728 = vunpack.c.l.b16 %v154
  %v729 = vunpack.c.h.b16 %v154
  %v730 = vunpack.c.l.b16 %v155
  %v731 = vunpack.c.h.b16 %v155
  %v732 = vunpack.c.l.b16 %v156
  %v733 = vunpack.c.h.b16 %v156
  %v734 = vunpack.c.l.b16 %v157
  %v735 = vunpack.c.h.b16 %v157
  %v736 = vunpack.c.l.b16 %v158
  %v737 = vunpack.c.h.b16 %v158
  %v738 = vunpack.c.l.b16 %v159
  %v739 = vunpack.c.h.b16 %v159
  %v740 = vunpack.c.l.b16 %v160
  %v741 = vunpack.c.h.b16 %v160
  %v742 = vunpack.c.l.b16 %v161
  %v743 = vunpack.c.h.b16 %v161
  %v744 = vunpack.c.l.b16 %v162
  %v745 = vunpack.c.h.b16 %v162
  %v746 = vunpack.c.l.b16 %v163
  %v747 = vunpack.c.h.b16 %v163
  %v748 = vunpack.c.l.b16 %v164
  %v749 = vunpack.c.h.b16 %v164
  %v750 = vunpack.c.l.b16 %v165
  %v751 = vunpack.c.h.b16 %v165
  %v752 = vunpack.c.l.b16 %v166
  %v753 = vunpack.c.h.b16 %v166
  %v754 = vunpack.c.l.b16 %v167
  %v755 = vunpack.c.h.b16 %v167
  %v756 = vunpack.c.l.b16 %v168
  %v757 = vunpack.c.h.b16 %v168
  %v758 = vunpack.c.l.b16 %v169
  %v759 = vunpack.c.h.b16 %v169
  %v760 = vunpack.c.l.b16 %v170
  %v761 = vunpack.c.h.b16 %v170
  %v762 = vunpack.c.l.b16 %v171
  %v763 = vunpack.c.h.b16 %v171
  %v764 = vunpack.c.l.b16 %v172
  %v765 = vunpack.c.h.b16 %v172
  %v766 = vunpack.c.l.b16 %v173
  %v767 = vunpack.c.h.b16 %v173
  %v768 = vunpack.c.l.b16 %v174
  %v769 = vunpack.c.h.b16 %v174
  %v770 = vunpack.c.l.b16 %v175
  %v771 = vunpack.c.h.b16 %v175
  %v772 = vunpack.c.l.b16 %v176
  %v773 = vunpack.c.h.b16 %v176
  %v774 = vunpack.c.l.b16 %v177
  %v775 = vunpack.c.h.b16 %v177
  %v776 = vunpack.c.l.b16 %v178
  %v777 = vunpack.c.h.b16 %v178
  %v778 = vunpack.c.l.b16 %v179
  %v779 = vunpack.c.h.b16 %v179
  %v780 = vunpack.c.l.b16 %v180
  %v781 = vunpack.c.h.b16 %v180
  %v782 = vunpack.c.l.b16 %v181
  %v783 = vunpack.c.h.b16 %v181
  %v784 = vunpack.c.l.b16 %v182
  %v785 = vunpack.c.h.b16 %v182
  %v786 = vunpack.c.l.b16 %v183
  %v787 = vunpack.c.h.b16 %v183
  %v788 = vunpack.c.l.b16 %v184
  %v789 = vunpack.c.h.b16 %v184
  %v790 = vunpack.c.l.b16 %v185
  %v791 = vunpack.c.h.b16 %v185
  %v792 = vunpack.c.l.b16 %v186
  %v793 = vunpack.c.h.b16 %v186
  %v794 = vunpack.c.l.b16 %v187
  %v795 = vunpack.c.h.b16 %v187
  %v796 = vunpack.c.l.b16 %v188
  %v797 = vunpack.c.h.b16 %v188
  %v798 = vunpack.c.l.b16 %v189
  %v799 = vunpack.c.h.b16 %v189
  %v800 = vunpack.c.l.b16 %v190
  %v801 = vunpack.c.h.b16 %v190
  %v802 = vunpack.c.l.b16 %v191
  %v803 = vunpack.c.h.b16 %v191
  %v804 = vunpack.c.l.b16 %v192
  %v805 = vunpack.c.h.b16 %v192
  %v806 = vunpack.c.l.b16 %v193
  %v807 = vunpack.c.h.b16 %v193
  %v808 = vunpack.c.l.b16 %v194
  %v809 = vunpack.c.h.b16 %v194
  %v810 = vunpack.c.l.b16 %v195
  %v811 = vunpack.c.h.b16 %v195
  %v812 = vunpack.c.l.b16 %v196
  %v813 = vunpack.c.h.b16 %v196
  %v814 = vunpack.c.l.b16 %v197
  %v815 = vunpack.c.h.b16 %v197
  %v816 = vunpack.c.l.b16 %v198
  %v817 = vunpack.c.h.b16 %v198
  %v818 = vunpack.c.l.b16 %v199
  %v819 = vunpack.c.h.b16 %v199
  %v820 = vunpack.c.l.b16 %v200
  %v821 = vunpack.c.h.b16 %v200
  %v822 = vunpack.c.l.b16 %v201
  %v823 = vunpack.c.h.b16 %v201
  %v824 = vunpack.c.l.b16 %v202
  %v825 = vunpack.c.h.b16 %v202
  %v826 = vunpack.c.l.b16 %v203
  %v827 = vunpack.c.h.b16 %v203
  %v828 = vunpack.c.l.b16 %v204
  %v829 = vunpack.c.h.b16 %v204
  %v830 = vunpack.c.l.b16 %v205
  %v831 = vunpack.c.h.b16 %v205
  %v832 = vunpack.c.l.b16 %v206
  %v833 = vunpack.c.h.b16 %v206
  %v834 = vunpack.c.l.b16 %v207
  %v835 = vunpack.c.h.b16 %v207
  %v836 = vunpack.c.l.b16 %v208
  %v837 = vunpack.c.h.b16 %v208
  %v838 = vunpack.c.l.b16 %v209
  %v839 = vunpack.c.h.b16 %v209
  %v840 = vunpack.c.l.b16 %v210
  %v841 = vunpack.c.h.b16 %v210
  %v842 = vunpack.c.l.b16 %v211
  %v843 = vunpack.c.h.b16 %v211
  %v844 = vunpack.c.l.b16 %v212
  %v845 = vunpack.c.h.b16 %v212
  %v846 = vunpack.c.l.b16 %v213
  %v847 = vunpack.c.h.b16 %v213
  %v848 = vunpack.c.l.b16 %v214
  %v849 = vunpack.c.h.b16 %v214
  %v850 = vunpack.c.l.b16 %v215
  %v851 = vunpack.c.h.b16 %v215
  %v852 = vunpack.c.l.b16 %v216
  %v853 = vunpack.c.h.b16 %v216
  %v854 = vunpack.c.l.b16 %v217
  %v855 = vunpack.c.h.b16 %v217
  %v856 = vunpack.c.l.b16 %v218
  %v857 = vunpack.c.h.b16 %v218
  %v858 = vunpack.c.l.b16 %v219
  %v859 = vunpack.c.h.b16 %v219
  %v860 = vunpack.c.l.b16 %v220
  %v861 = vunpack.c.h.b16 %v220
  %v862 = vunpack.c.l.b16 %v221
  %v863 = vunpack.c.h.b16 %v221
  %v864 = vunpack.c.l.b16 %v222
  %v865 = vunpack.c.h.b16 %v222
  %v866 = vunpack.c.l.b16 %v223
  %v867 = vunpack.c.h.b16 %v223
  %v868 = vunpack.c.l.b16 %v224
  %v869 = vunpack.c.h.b16 %v224
  %v870 = vpack.c.b16 %v482, %v478
  %v871 = vpack.c.b16 %v483, %v479
  %v872 = vpack.c.b16 %v484, %v480
  %v873 = vpack.c.b16 %v485, %v481
  %v874 = vpack.c.b16 %v490, %v486
  %v875 = vpack.c.b16 %v491, %v487
  %v876 = vpack.c.b16 %v492, %v488
  %v877 = vpack.c.b16 %v493, %v489
  %v878 = vpack.c.b16 %v498, %v494
  %v879 = vpack.c.b16 %v499, %v495
  %v880 = vpack.c.b16 %v500, %v496
  %v881 = vpack.c.b16 %v501, %v497
  %v882 = vpack.c.b16 %v506, %v502
  %v883 = vpack.c.b16 %v507, %v503
  %v884 = vpack.c.b16 %v508, %v504
  %v885 = vpack.c.b16 %v509, %v505
  %v886 = vpack.c.b16 %v514, %v510
  %v887 = vpack.c.b16 %v515, %v511
  %v888 = vpack.c.b16 %v516, %v512
  %v889 = vpack.c.b16 %v517, %v513
  %v890 = vpack.c.b16 %v522, %v518
  %v891 = vpack.c.b16 %v523, %v519
  %v892 = vpack.c.b16 %v524, %v520
  %v893 = vpack.c.b16 %v525, %v521
  %v894 = vpack.c.b16 %v530, %v526
  %v895 = vpack.c.b16 %v531, %v527
  %v896 = vpack.c.b16 %v532, %v528
  %v897 = vpack.c.b16 %v533, %v529
  %v898 = vpack.c.b16 %v538, %v534
  %v899 = vpack.c.b16 %v539, %v535
  %v900 = vpack.c.b16 %v540, %v536
  %v901 = vpack.c.b16 %v541, %v537
  %v902 = vpack.c.b16 %v546, %v542
  %v903 = vpack.c.b16 %v547, %v543
  %v904 = vpack.c.b16 %v548, %v544
  %v905 = vpack.c.b16 %v549, %v545
  %v906 = vpack.c.b16 %v554, %v550
  %v907 = vpack.c.b16 %v555, %v551
  %v908 = vpack.c.b16 %v556, %v552
  %v909 = vpack.c.b16 %v557, %v553
  %v910 = vpack.c.b16 %v562, %v558
  %v911 = vpack.c.b16 %v563, %v559
  %v912 = vpack.c.b16 %v564, %v560
  %v913 = vpack.c.b16 %v565, %v561
  %v914 = vpack.c.b16 %v570, %v566
  %v915 = vpack.c.b16 %v571, %v567
  %v916 = vpack.c.b16 %v572, %v568
  %v917 = vpack.c.b16 %v573, %v569
  %v918 = vpack.c.b16 %v578, %v574
  %v919 = vpack.c.b16 %v579, %v575
  %v920 = vpack.c.b16 %v580, %v576
  %v921 = vpack.c.b16 %v581, %v577
  %v922 = vpack.c.b16 %v586, %v582
  %v923 = vpack.c.b16 %v587, %v583
  %v924 = vpack.c.b16 %v588, %v584
  %v925 = vpack.c.b16 %v589, %v585
  %v926 = vpack.c.b16 %v594, %v590
  %v927 = vpack.c.b16 %v595, %v591
  %v928 = vpack.c.b16 %v596, %v592
  %v929 = vpack.c.b16 %v597, %v593
  %v930 = vpack.c.b16 %v602, %v598
  %v931 = vpack.c.b16 %v603, %v599
  %v932 = vpack.c.b16 %v604, %v600
  %v933 = vpack.c.b16 %v605, %v601
  %v934 = vpack.c.b16 %v610, %v606
  %v935 = vpack.c.b16 %v611, %v607
  %v936 = vpack.c.b16 %v612, %v608
  %v937 = vpack.c.b16 %v613, %v609
  %v938 = vpack.c.b16 %v618, %v614
  %v939 = vpack.c.b16 %v619, %v615
  %v940 = vpack.c.b16 %v620, %v616
  %v941 = vpack.c.b16 %v621, %v617
  %v942 = vpack.c.b16 %v626, %v622
  %v943 = vpack.c.b16 %v627, %v623
  %v944 = vpack.c.b16 %v628, %v624
  %v945 = vpack.c.b16 %v629, %v625
  %v946 = vpack.c.b16 %v634, %v630
  %v947 = vpack.c.b16 %v635, %v631
  %v948 = vpack.c.b16 %v636, %v632
  %v949 = vpack.c.b16 %v637, %v633
  %v950 = vpack.c.b16 %v642, %v638
  %v951 = vpack.c.b16 %v643, %v639
  %v952 = vpack.c.b16 %v644, %v640
  %v953 = vpack.c.b16 %v645, %v641
  %v954 = vpack.c.b16 %v650, %v646
  %v955 = vpack.c.b16 %v651, %v647
  %v956 = vpack.c.b16 %v652, %v648
  %v957 = vpack.c.b16 %v653, %v649
  %v958 = vpack.c.b16 %v658, %v654
  %v959 = vpack.c.b16 %v659, %v655
  %v960 = vpack.c.b16 %v660, %v656
  %v961 = vpack.c.b16 %v661, %v657
  %v962 = vpack.c.b16 %v666, %v662
  %v963 = vpack.c.b16 %v667, %v663
  %v964 = vpack.c.b16 %v668, %v664
  %v965 = vpack.c.b16 %v669, %v665
  %v966 = vpack.c.b16 %v674, %v670
  %v967 = vpack.c.b16 %v675, %v671
  %v968 = vpack.c.b16 %v676, %v672
  %v969 = vpack.c.b16 %v677, %v673
  %v970 = vpack.c.b16 %v682, %v678
  %v971 = vpack.c.b16 %v683, %v679
  %v972 = vpack.c.b16 %v684, %v680
  %v973 = vpack.c.b16 %v685, %v681
  %v974 = vpack.c.b16 %v690, %v686
  %v975 = vpack.c.b16 %v691, %v687
  %v976 = vpack.c.b16 %v692, %v688
  %v977 = vpack.c.b16 %v693, %v689
  %v978 = vpack.c.b16 %v698, %v694
  %v979 = vpack.c.b16 %v699, %v695
  %v980 = vpack.c.b16 %v700, %v696
  %v981 = vpack.c.b16 %v701, %v697
  %v982 = vpack.c.b16 %v706, %v702
  %v983 = vpack.c.b16 %v707, %v703
  %v984 = vpack.c.b16 %v708, %v704
  %v985 = vpack.c.b16 %v709, %v705
  %v986 = vpack.c.b16 %v714, %v710
  %v987 = vpack.c.b16 %v715, %v711
  %v988 = vpack.c.b16 %v716, %v712
  %v989 = vpack.c.b16 %v717, %v713
  %v990 = vpack.c.b16 %v722, %v718
  %v991 = vpack.c.b16 %v723, %v719
  %v992 = vpack.c.b16 %v724, %v720
  %v993 = vpack.c.b16 %v725, %v721
  %v994 = vpack.c.b16 %v730, %v726
  %v995 = vpack.c.b16 %v731, %v727
  %v996 = vpack.c.b16 %v732, %v728
  %v997 = vpack.c.b16 %v733, %v729
  %v998 = vpack.c.b16 %v738, %v734
  %v999 = vpack.c.b16 %v739, %v735
  %v1000 = vpack.c.b16 %v740, %v736
  %v1001 = vpack.c.b16 %v741, %v737
  %v1002 = vpack.c.b16 %v746, %v742
  %v1003 = vpack.c.b16 %v747, %v743
  %v1004 = vpack.c.b16 %v748, %v744
  %v1005 = vpack.c.b16 %v749, %v745
  %v1006 = vpack.c.b16 %v754, %v750
  %v1007 = vpack.c.b16 %v755, %v751
  %v1008 = vpack.c.b16 %v756, %v752
  %v1009 = vpack.c.b16 %v757, %v753
  %v1010 = vpack.c.b16 %v762, %v758
  %v1011 = vpack.c.b16 %v763, %v759
  %v1012 = vpack.c.b16 %v764, %v760
  %v1013 = vpack.c.b16 %v765, %v761
  %v1014 = vpack.c.b16 %v770, %v766
  %v1015 = vpack.c.b16 %v771, %v767
  %v1016 = vpack.c.b16 %v772, %v768
  %v1017 = vpack.c.b16 %v773, %v769
  %v1018 = vpack.c.b16 %v778, %v774
  %v1019 = vpack.c.b16 %v779, %v775
  %v1020 = vpack.c.b16 %v780, %v776
  %v1021 = vpack.c.b16 %v781, %v777
  %v1022 = vpack.c.b16 %v786, %v782
  %v1023 = vpack.c.b16 %v787, %v783
  %v1024 = vpack.c.b16 %v788, %v784
  %v1025 = vpack.c.b16 %v789, %v785
  %v1026 = vpack.c.b16 %v794, %v790
  %v1027 = vpack.c.b16 %v795, %v791
  %v1028 = vpack.c.b16 %v796, %v792
  %v1029 = vpack.c.b16 %v797, %v793
  %v1030 = vpack.c.b16 %v802, %v798
  %v1031 = vpack.c.b16 %v803, %v799
  %v1032 = vpack.c.b16 %v804, %v800
  %v1033 = vpack.c.b16 %v805, %v801
  %v1034 = vpack.c.b16 %v810, %v806
  %v1035 = vpack.c.b16 %v811, %v807
  %v1036 = vpack.c.b16 %v812, %v808
  %v1037 = vpack.c.b16 %v813, %v809
  %v1038 = vpack.c.b16 %v818, %v814
  %v1039 = vpack.c.b16 %v819, %v815
  %v1040 = vpack.c.b16 %v820, %v816
  %v1041 = vpack.c.b16 %v821, %v817
  %v1042 = vpack.c.b16 %v826, %v822
  %v1043 = vpack.c.b16 %v827, %v823
  %v1044 = vpack.c.b16 %v828, %v824
  %v1045 = vpack.c.b16 %v829, %v825
  %v1046 = vpack.c.b16 %v834, %v830
  %v1047 = vpack.c.b16 %v835, %v831
  %v1048 = vpack.c.b16 %v836, %v832
  %v1049 = vpack.c.b16 %v837, %v833
  %v1050 = vpack.c.b16 %v842, %v838
  %v1051 = vpack.c.b16 %v843, %v839
  %v1052 = vpack.c.b16 %v844, %v840
  %v1053 = vpack.c.b16 %v845, %v841
  %v1054 = vpack.c.b16 %v850, %v846
  %v1055 = vpack.c.b16 %v851, %v847
  %v1056 = vpack.c.b16 %v852, %v848
  %v1057 = vpack.c.b16 %v853, %v849
  %v1058 = vpack.c.b16 %v858, %v854
  %v1059 = vpack.c.b16 %v859, %v855
  %v1060 = vpack.c.b16 %v860, %v856
  %v1061 = vpack.c.b16 %v861, %v857
  %v1062 = vpack.c.b16 %v866, %v862
  %v1063 = vpack.c.b16 %v867, %v863
  %v1064 = vpack.c.b16 %v868, %v864
  %v1065 = vpack.c.b16 %v869, %v865
  %vm1262 = vcmask 130048
  %v1264 = vsel %vm1262, %v275, 0
  %1266 = vmatprep.subr.bf16.mxu0 %v899
  %1267 = vmatpush1.bf16.msra.mxu0 %v898
  %1268 = vmatprep.subr.bf16.mxu0 %v895
  %1269 = vmatpush1.bf16.msra.mxu0 %v894
  %1270 = vmatprep.subr.bf16.mxu0 %v891
  %1271 = vmatpush1.bf16.msra.mxu0 %v890
  %1272 = vmatprep.subr.bf16.mxu0 %v887
  %1273 = vmatpush1.bf16.msra.mxu0 %v886
  %1274 = vmatprep.subr.bf16.mxu0 %v883
  %1275 = vmatpush1.bf16.msra.mxu0 %v882
  %1276 = vmatprep.subr.bf16.mxu0 %v879
  %1277 = vmatpush1.bf16.msra.mxu0 %v878
  %1278 = vmatprep.subr.bf16.mxu0 %v875
  %1279 = vmatpush1.bf16.msra.mxu0 %v874
  %1280 = vmatprep.subr.bf16.mxu0 %v871
  %1281 = vmatpush1.bf16.msra.mxu0 %v870
  %1282 = vmatprep.subr.bf16.mxu0 %v931
  %1283 = vmatpush2.bf16.msra.mxu0 %v930
  %1284 = vmatprep.subr.bf16.mxu0 %v927
  %1285 = vmatpush2.bf16.msra.mxu0 %v926
  %1286 = vmatprep.subr.bf16.mxu0 %v923
  %1287 = vmatpush2.bf16.msra.mxu0 %v922
  %1288 = vmatprep.subr.bf16.mxu0 %v919
  %1289 = vmatpush2.bf16.msra.mxu0 %v918
  %1290 = vmatprep.subr.bf16.mxu0 %v915
  %1291 = vmatpush2.bf16.msra.mxu0 %v914
  %1292 = vmatprep.subr.bf16.mxu0 %v911
  %1293 = vmatpush2.bf16.msra.mxu0 %v910
  %1294 = vmatprep.subr.bf16.mxu0 %v907
  %1295 = vmatpush2.bf16.msra.mxu0 %v906
  %1296 = vmatprep.subr.bf16.mxu0 %v903
  %1297 = vmatpush2.bf16.msra.mxu0 %v902
  %1298 = vmatprep.mubr.bf16.mxu0 %v270
  %1299 = vmatmul.mubr.bf16.gmra.mxu0 %v269
  %v1300 = vpop.f32.mrf.mxu0
  %v1301 = vadd.f32 %v230, %v1300
  %v1302 = vpop.f32.mrf.mxu0
  %v1303 = vadd.f32 %v234, %v1302
  %v1304 = vpop.f32.mrf.mxu0
  %v1305 = vadd.f32 %v230, %v1304
  %v1306 = vpop.f32.mrf.mxu0
  %v1307 = vadd.f32 %v234, %v1306
  %1308 = vdwg.mxu0
  %1309 = vmatprep.subr.bf16.mxu0 %v963
  %1310 = vmatpush1.bf16.msra.mxu0 %v962
  %1311 = vmatprep.subr.bf16.mxu0 %v959
  %1312 = vmatpush1.bf16.msra.mxu0 %v958
  %1313 = vmatprep.subr.bf16.mxu0 %v955
  %1314 = vmatpush1.bf16.msra.mxu0 %v954
  %1315 = vmatprep.subr.bf16.mxu0 %v951
  %1316 = vmatpush1.bf16.msra.mxu0 %v950
  %1317 = vmatprep.subr.bf16.mxu0 %v947
  %1318 = vmatpush1.bf16.msra.mxu0 %v946
  %1319 = vmatprep.subr.bf16.mxu0 %v943
  %1320 = vmatpush1.bf16.msra.mxu0 %v942
  %1321 = vmatprep.subr.bf16.mxu0 %v939
  %1322 = vmatpush1.bf16.msra.mxu0 %v938
  %1323 = vmatprep.subr.bf16.mxu0 %v935
  %1324 = vmatpush1.bf16.msra.mxu0 %v934
  %1325 = vmatprep.subr.bf16.mxu0 %v995
  %1326 = vmatpush2.bf16.msra.mxu0 %v994
  %1327 = vmatprep.subr.bf16.mxu0 %v991
  %1328 = vmatpush2.bf16.msra.mxu0 %v990
  %1329 = vmatprep.subr.bf16.mxu0 %v987
  %1330 = vmatpush2.bf16.msra.mxu0 %v986
  %1331 = vmatprep.subr.bf16.mxu0 %v983
  %1332 = vmatpush2.bf16.msra.mxu0 %v982
  %1333 = vmatprep.subr.bf16.mxu0 %v979
  %1334 = vmatpush2.bf16.msra.mxu0 %v978
  %1335 = vmatprep.subr.bf16.mxu0 %v975
  %1336 = vmatpush2.bf16.msra.mxu0 %v974
  %1337 = vmatprep.subr.bf16.mxu0 %v971
  %1338 = vmatpush2.bf16.msra.mxu0 %v970
  %1339 = vmatprep.subr.bf16.mxu0 %v967
  %1340 = vmatpush2.bf16.msra.mxu0 %v966
  %1341 = vmatprep.mubr.bf16.mxu0 %v272
  %1342 = vmatmul.mubr.bf16.gmra.mxu0 %v271
  %v1343 = vpop.f32.mrf.mxu0
  %v1344 = vadd.f32 %v1301, %v1343
  %v1345 = vpop.f32.mrf.mxu0
  %v1346 = vadd.f32 %v1303, %v1345
  %v1347 = vpop.f32.mrf.mxu0
  %v1348 = vadd.f32 %v1305, %v1347
  %v1349 = vpop.f32.mrf.mxu0
  %v1350 = vadd.f32 %v1307, %v1349
  %1351 = vdwg.mxu0
  %1352 = vmatprep.subr.bf16.mxu0 %v1027
  %1353 = vmatpush1.bf16.msra.mxu0 %v1026
  %1354 = vmatprep.subr.bf16.mxu0 %v1023
  %1355 = vmatpush1.bf16.msra.mxu0 %v1022
  %1356 = vmatprep.subr.bf16.mxu0 %v1019
  %1357 = vmatpush1.bf16.msra.mxu0 %v1018
  %1358 = vmatprep.subr.bf16.mxu0 %v1015
  %1359 = vmatpush1.bf16.msra.mxu0 %v1014
  %1360 = vmatprep.subr.bf16.mxu0 %v1011
  %1361 = vmatpush1.bf16.msra.mxu0 %v1010
  %1362 = vmatprep.subr.bf16.mxu0 %v1007
  %1363 = vmatpush1.bf16.msra.mxu0 %v1006
  %1364 = vmatprep.subr.bf16.mxu0 %v1003
  %1365 = vmatpush1.bf16.msra.mxu0 %v1002
  %1366 = vmatprep.subr.bf16.mxu0 %v999
  %1367 = vmatpush1.bf16.msra.mxu0 %v998
  %1368 = vmatprep.subr.bf16.mxu0 %v1059
  %1369 = vmatpush2.bf16.msra.mxu0 %v1058
  %1370 = vmatprep.subr.bf16.mxu0 %v1055
  %1371 = vmatpush2.bf16.msra.mxu0 %v1054
  %1372 = vmatprep.subr.bf16.mxu0 %v1051
  %1373 = vmatpush2.bf16.msra.mxu0 %v1050
  %1374 = vmatprep.subr.bf16.mxu0 %v1047
  %1375 = vmatpush2.bf16.msra.mxu0 %v1046
  %1376 = vmatprep.subr.bf16.mxu0 %v1043
  %1377 = vmatpush2.bf16.msra.mxu0 %v1042
  %1378 = vmatprep.subr.bf16.mxu0 %v1039
  %1379 = vmatpush2.bf16.msra.mxu0 %v1038
  %1380 = vmatprep.subr.bf16.mxu0 %v1035
  %1381 = vmatpush2.bf16.msra.mxu0 %v1034
  %1382 = vmatprep.subr.bf16.mxu0 %v1031
  %1383 = vmatpush2.bf16.msra.mxu0 %v1030
  %1384 = vmatprep.mubr.bf16.mxu0 %v274
  %1385 = vmatmul.mubr.bf16.gmra.mxu0 %v273
  %v1386 = vpop.f32.mrf.mxu0
  %v1387 = vadd.f32 %v1344, %v1386
  %v1388 = vpop.f32.mrf.mxu0
  %v1389 = vadd.f32 %v1346, %v1388
  %v1390 = vpop.f32.mrf.mxu0
  %v1391 = vadd.f32 %v1348, %v1390
  %v1392 = vpop.f32.mrf.mxu0
  %v1393 = vadd.f32 %v1350, %v1392
  %1394 = vdwg.mxu0
  %1395 = vmatprep.subr.bf16.mxu0 0
  %1396 = vmatpush1.bf16.msra.mxu0 0
  %1397 = vmatprep.subr.bf16.mxu0 0
  %1398 = vmatpush1.bf16.msra.mxu0 0
  %1399 = vmatprep.subr.bf16.mxu0 0
  %1400 = vmatpush1.bf16.msra.mxu0 0
  %1401 = vmatprep.subr.bf16.mxu0 0
  %1402 = vmatpush1.bf16.msra.mxu0 0
  %1403 = vmatprep.subr.bf16.mxu0 0
  %1404 = vmatpush1.bf16.msra.mxu0 0
  %1405 = vmatprep.subr.bf16.mxu0 0
  %1406 = vmatpush1.bf16.msra.mxu0 0
  %1407 = vmatprep.subr.bf16.mxu0 0
  %1408 = vmatpush1.bf16.msra.mxu0 0
  %1409 = vmatprep.subr.bf16.mxu0 %v1063
  %1410 = vmatpush1.bf16.msra.mxu0 %v1062
  %1411 = vmatprep.subr.bf16.mxu0 0
  %1412 = vmatpush2.bf16.msra.mxu0 0
  %1413 = vmatprep.subr.bf16.mxu0 0
  %1414 = vmatpush2.bf16.msra.mxu0 0
  %1415 = vmatprep.subr.bf16.mxu0 0
  %1416 = vmatpush2.bf16.msra.mxu0 0
  %1417 = vmatprep.subr.bf16.mxu0 0
  %1418 = vmatpush2.bf16.msra.mxu0 0
  %1419 = vmatprep.subr.bf16.mxu0 0
  %1420 = vmatpush2.bf16.msra.mxu0 0
  %1421 = vmatprep.subr.bf16.mxu0 0
  %1422 = vmatpush2.bf16.msra.mxu0 0
  %1423 = vmatprep.subr.bf16.mxu0 0
  %1424 = vmatpush2.bf16.msra.mxu0 0
  %1425 = vmatprep.subr.bf16.mxu0 0
  %1426 = vmatpush2.bf16.msra.mxu0 0
  %1427 = vmatprep.mubr.bf16.mxu0 0
  %1428 = vmatmul.mubr.bf16.gmra.mxu0 %v1264
  %v1429 = vpop.f32.mrf.mxu0
  %v1430 = vadd.f32 %v1387, %v1429
  %v1431 = vpop.f32.mrf.mxu0
  %v1432 = vadd.f32 %v1389, %v1431
  %v1433 = vpop.f32.mrf.mxu0
  %v1434 = vadd.f32 %v1391, %v1433
  %v1435 = vpop.f32.mrf.mxu0
  %v1436 = vadd.f32 %v1393, %v1435
  %1437 = vdwg.mxu0
  %1438 = vmatprep.subr.bf16.mxu0 %v901
  %1439 = vmatpush1.bf16.msra.mxu0 %v900
  %1440 = vmatprep.subr.bf16.mxu0 %v897
  %1441 = vmatpush1.bf16.msra.mxu0 %v896
  %1442 = vmatprep.subr.bf16.mxu0 %v893
  %1443 = vmatpush1.bf16.msra.mxu0 %v892
  %1444 = vmatprep.subr.bf16.mxu0 %v889
  %1445 = vmatpush1.bf16.msra.mxu0 %v888
  %1446 = vmatprep.subr.bf16.mxu0 %v885
  %1447 = vmatpush1.bf16.msra.mxu0 %v884
  %1448 = vmatprep.subr.bf16.mxu0 %v881
  %1449 = vmatpush1.bf16.msra.mxu0 %v880
  %1450 = vmatprep.subr.bf16.mxu0 %v877
  %1451 = vmatpush1.bf16.msra.mxu0 %v876
  %1452 = vmatprep.subr.bf16.mxu0 %v873
  %1453 = vmatpush1.bf16.msra.mxu0 %v872
  %1454 = vmatprep.subr.bf16.mxu0 %v933
  %1455 = vmatpush2.bf16.msra.mxu0 %v932
  %1456 = vmatprep.subr.bf16.mxu0 %v929
  %1457 = vmatpush2.bf16.msra.mxu0 %v928
  %1458 = vmatprep.subr.bf16.mxu0 %v925
  %1459 = vmatpush2.bf16.msra.mxu0 %v924
  %1460 = vmatprep.subr.bf16.mxu0 %v921
  %1461 = vmatpush2.bf16.msra.mxu0 %v920
  %1462 = vmatprep.subr.bf16.mxu0 %v917
  %1463 = vmatpush2.bf16.msra.mxu0 %v916
  %1464 = vmatprep.subr.bf16.mxu0 %v913
  %1465 = vmatpush2.bf16.msra.mxu0 %v912
  %1466 = vmatprep.subr.bf16.mxu0 %v909
  %1467 = vmatpush2.bf16.msra.mxu0 %v908
  %1468 = vmatprep.subr.bf16.mxu0 %v905
  %1469 = vmatpush2.bf16.msra.mxu0 %v904
  %1470 = vmatprep.mubr.bf16.mxu0 %v270
  %1471 = vmatmul.mubr.bf16.gmra.mxu0 %v269
  %v1472 = vpop.f32.mrf.mxu0
  %v1473 = vadd.f32 %v238, %v1472
  %v1474 = vpop.f32.mrf.mxu0
  %v1475 = vadd.f32 %v242, %v1474
  %v1476 = vpop.f32.mrf.mxu0
  %v1477 = vadd.f32 %v238, %v1476
  %v1478 = vpop.f32.mrf.mxu0
  %v1479 = vadd.f32 %v242, %v1478
  %1480 = vdwg.mxu0
  %1481 = vmatprep.subr.bf16.mxu0 %v965
  %1482 = vmatpush1.bf16.msra.mxu0 %v964
  %1483 = vmatprep.subr.bf16.mxu0 %v961
  %1484 = vmatpush1.bf16.msra.mxu0 %v960
  %1485 = vmatprep.subr.bf16.mxu0 %v957
  %1486 = vmatpush1.bf16.msra.mxu0 %v956
  %1487 = vmatprep.subr.bf16.mxu0 %v953
  %1488 = vmatpush1.bf16.msra.mxu0 %v952
  %1489 = vmatprep.subr.bf16.mxu0 %v949
  %1490 = vmatpush1.bf16.msra.mxu0 %v948
  %1491 = vmatprep.subr.bf16.mxu0 %v945
  %1492 = vmatpush1.bf16.msra.mxu0 %v944
  %1493 = vmatprep.subr.bf16.mxu0 %v941
  %1494 = vmatpush1.bf16.msra.mxu0 %v940
  %1495 = vmatprep.subr.bf16.mxu0 %v937
  %1496 = vmatpush1.bf16.msra.mxu0 %v936
  %1497 = vmatprep.subr.bf16.mxu0 %v997
  %1498 = vmatpush2.bf16.msra.mxu0 %v996
  %1499 = vmatprep.subr.bf16.mxu0 %v993
  %1500 = vmatpush2.bf16.msra.mxu0 %v992
  %1501 = vmatprep.subr.bf16.mxu0 %v989
  %1502 = vmatpush2.bf16.msra.mxu0 %v988
  %1503 = vmatprep.subr.bf16.mxu0 %v985
  %1504 = vmatpush2.bf16.msra.mxu0 %v984
  %1505 = vmatprep.subr.bf16.mxu0 %v981
  %1506 = vmatpush2.bf16.msra.mxu0 %v980
  %1507 = vmatprep.subr.bf16.mxu0 %v977
  %1508 = vmatpush2.bf16.msra.mxu0 %v976
  %1509 = vmatprep.subr.bf16.mxu0 %v973
  %1510 = vmatpush2.bf16.msra.mxu0 %v972
  %1511 = vmatprep.subr.bf16.mxu0 %v969
  %1512 = vmatpush2.bf16.msra.mxu0 %v968
  %1513 = vmatprep.mubr.bf16.mxu0 %v272
  %1514 = vmatmul.mubr.bf16.gmra.mxu0 %v271
  %v1515 = vpop.f32.mrf.mxu0
  %v1516 = vadd.f32 %v1473, %v1515
  %v1517 = vpop.f32.mrf.mxu0
  %v1518 = vadd.f32 %v1475, %v1517
  %v1519 = vpop.f32.mrf.mxu0
  %v1520 = vadd.f32 %v1477, %v1519
  %v1521 = vpop.f32.mrf.mxu0
  %v1522 = vadd.f32 %v1479, %v1521
  %1523 = vdwg.mxu0
  %1524 = vmatprep.subr.bf16.mxu0 %v1029
  %1525 = vmatpush1.bf16.msra.mxu0 %v1028
  %1526 = vmatprep.subr.bf16.mxu0 %v1025
  %1527 = vmatpush1.bf16.msra.mxu0 %v1024
  %1528 = vmatprep.subr.bf16.mxu0 %v1021
  %1529 = vmatpush1.bf16.msra.mxu0 %v1020
  %1530 = vmatprep.subr.bf16.mxu0 %v1017
  %1531 = vmatpush1.bf16.msra.mxu0 %v1016
  %1532 = vmatprep.subr.bf16.mxu0 %v1013
  %1533 = vmatpush1.bf16.msra.mxu0 %v1012
  %1534 = vmatprep.subr.bf16.mxu0 %v1009
  %1535 = vmatpush1.bf16.msra.mxu0 %v1008
  %1536 = vmatprep.subr.bf16.mxu0 %v1005
  %1537 = vmatpush1.bf16.msra.mxu0 %v1004
  %1538 = vmatprep.subr.bf16.mxu0 %v1001
  %1539 = vmatpush1.bf16.msra.mxu0 %v1000
  %1540 = vmatprep.subr.bf16.mxu0 %v1061
  %1541 = vmatpush2.bf16.msra.mxu0 %v1060
  %1542 = vmatprep.subr.bf16.mxu0 %v1057
  %1543 = vmatpush2.bf16.msra.mxu0 %v1056
  %1544 = vmatprep.subr.bf16.mxu0 %v1053
  %1545 = vmatpush2.bf16.msra.mxu0 %v1052
  %1546 = vmatprep.subr.bf16.mxu0 %v1049
  %1547 = vmatpush2.bf16.msra.mxu0 %v1048
  %1548 = vmatprep.subr.bf16.mxu0 %v1045
  %1549 = vmatpush2.bf16.msra.mxu0 %v1044
  %1550 = vmatprep.subr.bf16.mxu0 %v1041
  %1551 = vmatpush2.bf16.msra.mxu0 %v1040
  %1552 = vmatprep.subr.bf16.mxu0 %v1037
  %1553 = vmatpush2.bf16.msra.mxu0 %v1036
  %1554 = vmatprep.subr.bf16.mxu0 %v1033
  %1555 = vmatpush2.bf16.msra.mxu0 %v1032
  %1556 = vmatprep.mubr.bf16.mxu0 %v274
  %1557 = vmatmul.mubr.bf16.gmra.mxu0 %v273
  %v1558 = vpop.f32.mrf.mxu0
  %v1559 = vadd.f32 %v1516, %v1558
  %v1560 = vpop.f32.mrf.mxu0
  %v1561 = vadd.f32 %v1518, %v1560
  %v1562 = vpop.f32.mrf.mxu0
  %v1563 = vadd.f32 %v1520, %v1562
  %v1564 = vpop.f32.mrf.mxu0
  %v1565 = vadd.f32 %v1522, %v1564
  %1566 = vdwg.mxu0
  %1567 = vmatprep.subr.bf16.mxu0 0
  %1568 = vmatpush1.bf16.msra.mxu0 0
  %1569 = vmatprep.subr.bf16.mxu0 0
  %1570 = vmatpush1.bf16.msra.mxu0 0
  %1571 = vmatprep.subr.bf16.mxu0 0
  %1572 = vmatpush1.bf16.msra.mxu0 0
  %1573 = vmatprep.subr.bf16.mxu0 0
  %1574 = vmatpush1.bf16.msra.mxu0 0
  %1575 = vmatprep.subr.bf16.mxu0 0
  %1576 = vmatpush1.bf16.msra.mxu0 0
  %1577 = vmatprep.subr.bf16.mxu0 0
  %1578 = vmatpush1.bf16.msra.mxu0 0
  %1579 = vmatprep.subr.bf16.mxu0 0
  %1580 = vmatpush1.bf16.msra.mxu0 0
  %1581 = vmatprep.subr.bf16.mxu0 %v1065
  %1582 = vmatpush1.bf16.msra.mxu0 %v1064
  %1583 = vmatprep.subr.bf16.mxu0 0
  %1584 = vmatpush2.bf16.msra.mxu0 0
  %1585 = vmatprep.subr.bf16.mxu0 0
  %1586 = vmatpush2.bf16.msra.mxu0 0
  %1587 = vmatprep.subr.bf16.mxu0 0
  %1588 = vmatpush2.bf16.msra.mxu0 0
  %1589 = vmatprep.subr.bf16.mxu0 0
  %1590 = vmatpush2.bf16.msra.mxu0 0
  %1591 = vmatprep.subr.bf16.mxu0 0
  %1592 = vmatpush2.bf16.msra.mxu0 0
  %1593 = vmatprep.subr.bf16.mxu0 0
  %1594 = vmatpush2.bf16.msra.mxu0 0
  %1595 = vmatprep.subr.bf16.mxu0 0
  %1596 = vmatpush2.bf16.msra.mxu0 0
  %1597 = vmatprep.subr.bf16.mxu0 0
  %1598 = vmatpush2.bf16.msra.mxu0 0
  %1599 = vmatprep.mubr.bf16.mxu0 0
  %1600 = vmatmul.mubr.bf16.gmra.mxu0 %v1264
  %v1601 = vpop.f32.mrf.mxu0
  %v1602 = vadd.f32 %v1559, %v1601
  %v1603 = vpop.f32.mrf.mxu0
  %v1604 = vadd.f32 %v1561, %v1603
  %v1605 = vpop.f32.mrf.mxu0
  %v1606 = vadd.f32 %v1563, %v1605
  %v1607 = vpop.f32.mrf.mxu0
  %v1608 = vadd.f32 %v1565, %v1607
  %1609 = vdwg.mxu0
  %v1610 = vmax.f32 %v1430, 0.0
  %v1611 = vmax.f32 %v1432, 0.0
  %v1612 = vmax.f32 %v1602, 0.0
  %v1613 = vmax.f32 %v1604, 0.0
  %v1614 = vmax.f32 %v1434, 0.0
  %v1615 = vmax.f32 %v1436, 0.0
  %v1616 = vmax.f32 %v1606, 0.0
  %v1617 = vmax.f32 %v1608, 0.0
  %v1618 = vpack.c.bf16 %v1614, %v1610
  %v1619 = vpack.c.bf16 %v1615, %v1611
  %v1620 = vpack.c.bf16 %v1616, %v1612
  %v1621 = vpack.c.bf16 %v1617, %v1613
  %v1622 = vld [vmem:[%s3] sm:$0xf]
  %v1623 = vld [vmem:[%s3 + $0x4] sm:$0xf]
  %v1624 = vld [vmem:[%s3 + $0x8] sm:$0xf]
  %v1625 = vld [vmem:[%s3 + $0xc] sm:$0xf]
  %v1626 = vld [vmem:[%s3 + $0x10] sm:$0xf]
  %v1627 = vld [vmem:[%s3 + $0x14] sm:$0xf]
  %v1628 = vld [vmem:[%s3 + $0x18] sm:$0xf]
  %v1629 = vld [vmem:[%s3 + $0x1c] sm:$0xf]
  %v1630 = vld [vmem:[%s3 + $0x20] sm:$0xf]
  %v1631 = vld [vmem:[%s3 + $0x24] sm:$0xf]
  %v1632 = vld [vmem:[%s3 + $0x28] sm:$0xf]
  %v1633 = vld [vmem:[%s3 + $0x2c] sm:$0xf]
  %v1634 = vld [vmem:[%s3 + $0x30] sm:$0xf]
  %v1635 = vld [vmem:[%s3 + $0x34] sm:$0xf]
  %v1636 = vld [vmem:[%s3 + $0x38] sm:$0xf]
  %v1637 = vld [vmem:[%s3 + $0x3c] sm:$0xf]
  %v1638 = vld [vmem:[%s3 + $0x40] sm:$0xf]
  %v1639 = vld [vmem:[%s3 + $0x44] sm:$0xf]
  %v1640 = vld [vmem:[%s3 + $0x48] sm:$0xf]
  %v1641 = vld [vmem:[%s3 + $0x4c] sm:$0xf]
  %v1642 = vld [vmem:[%s3 + $0x50] sm:$0xf]
  %v1643 = vld [vmem:[%s3 + $0x54] sm:$0xf]
  %v1644 = vld [vmem:[%s3 + $0x58] sm:$0xf]
  %v1645 = vld [vmem:[%s3 + $0x5c] sm:$0xf]
  %v1646 = vld [vmem:[%s3 + $0x60] sm:$0xf]
  %v1647 = vld [vmem:[%s3 + $0x64] sm:$0xf]
  %v1648 = vld [vmem:[%s3 + $0x68] sm:$0xf]
  %v1649 = vld [vmem:[%s3 + $0x6c] sm:$0xf]
  %v1650 = vld [vmem:[%s3 + $0x70] sm:$0xf]
  %v1651 = vld [vmem:[%s3 + $0x74] sm:$0xf]
  %v1652 = vld [vmem:[%s3 + $0x78] sm:$0xf]
  %v1653 = vld [vmem:[%s3 + $0x7c] sm:$0xf]
  %v1654 = vld [vmem:[%s3 + $0x80] sm:$0xf]
  %v1655 = vld [vmem:[%s3 + $0x84] sm:$0xf]
  %v1656 = vld [vmem:[%s3 + $0x88] sm:$0xf]
  %v1657 = vld [vmem:[%s3 + $0x8c] sm:$0xf]
  %v1658 = vld [vmem:[%s3 + $0x90] sm:$0xf]
  %v1659 = vld [vmem:[%s3 + $0x94] sm:$0xf]
  %v1660 = vld [vmem:[%s3 + $0x98] sm:$0xf]
  %v1661 = vld [vmem:[%s3 + $0x9c] sm:$0xf]
  %v1662 = vld [vmem:[%s3 + $0xa0] sm:$0xf]
  %v1663 = vld [vmem:[%s3 + $0xa4] sm:$0xf]
  %v1664 = vld [vmem:[%s3 + $0xa8] sm:$0xf]
  %v1665 = vld [vmem:[%s3 + $0xac] sm:$0xf]
  %v1666 = vld [vmem:[%s3 + $0xb0] sm:$0xf]
  %v1667 = vld [vmem:[%s3 + $0xb4] sm:$0xf]
  %v1668 = vld [vmem:[%s3 + $0xb8] sm:$0xf]
  %v1669 = vld [vmem:[%s3 + $0xbc] sm:$0xf]
  %v1670 = vld [vmem:[%s3 + $0xc0] sm:$0xf]
  %v1671 = vld [vmem:[%s3 + $0xc4] sm:$0xf]
  %v1672 = vld [vmem:[%s4] sm:$0x1]
  %v1674 = vlaneseq
  %v1675 = vshrl.u32 %v1674, 7
  %v1676 = vsub.s32 0, %v1675
  %v1677 = vrot.slane %v1672, %v1676
  %v1729 = vunpack.c.l.b16 %v1622
  %v1730 = vunpack.c.l.b16 %v1623
  %v1731 = vunpack.c.l.b16 %v1624
  %v1732 = vunpack.c.l.b16 %v1625
  %v1733 = vunpack.c.l.b16 %v1626
  %v1734 = vunpack.c.l.b16 %v1627
  %v1735 = vunpack.c.l.b16 %v1628
  %v1736 = vunpack.c.l.b16 %v1629
  %v1737 = vunpack.c.l.b16 %v1630
  %v1738 = vunpack.c.l.b16 %v1631
  %v1739 = vunpack.c.l.b16 %v1632
  %v1740 = vunpack.c.l.b16 %v1633
  %v1741 = vunpack.c.l.b16 %v1634
  %v1742 = vunpack.c.l.b16 %v1635
  %v1743 = vunpack.c.l.b16 %v1636
  %v1744 = vunpack.c.l.b16 %v1637
  %v1745 = vunpack.c.l.b16 %v1638
  %v1746 = vunpack.c.l.b16 %v1639
  %v1747 = vunpack.c.l.b16 %v1640
  %v1748 = vunpack.c.l.b16 %v1641
  %v1749 = vunpack.c.l.b16 %v1642
  %v1750 = vunpack.c.l.b16 %v1643
  %v1751 = vunpack.c.l.b16 %v1644
  %v1752 = vunpack.c.l.b16 %v1645
  %v1753 = vunpack.c.l.b16 %v1646
  %v1754 = vunpack.c.l.b16 %v1647
  %v1755 = vunpack.c.l.b16 %v1648
  %v1756 = vunpack.c.l.b16 %v1649
  %v1757 = vunpack.c.l.b16 %v1650
  %v1758 = vunpack.c.l.b16 %v1651
  %v1759 = vunpack.c.l.b16 %v1652
  %v1760 = vunpack.c.l.b16 %v1653
  %v1761 = vunpack.c.l.b16 %v1654
  %v1762 = vunpack.c.l.b16 %v1655
  %v1763 = vunpack.c.l.b16 %v1656
  %v1764 = vunpack.c.l.b16 %v1657
  %v1765 = vunpack.c.l.b16 %v1658
  %v1766 = vunpack.c.l.b16 %v1659
  %v1767 = vunpack.c.l.b16 %v1660
  %v1768 = vunpack.c.l.b16 %v1661
  %v1769 = vunpack.c.l.b16 %v1662
  %v1770 = vunpack.c.l.b16 %v1663
  %v1771 = vunpack.c.l.b16 %v1664
  %v1772 = vunpack.c.l.b16 %v1665
  %v1773 = vunpack.c.l.b16 %v1666
  %v1774 = vunpack.c.l.b16 %v1667
  %v1775 = vunpack.c.l.b16 %v1668
  %v1776 = vunpack.c.l.b16 %v1669
  %v1777 = vunpack.c.l.b16 %v1670
  %v1778 = vunpack.c.l.b16 %v1671
  %v1779 = vpack.c.b16 %v1730, %v1729
  %v1780 = vpack.c.b16 %v1732, %v1731
  %v1781 = vpack.c.b16 %v1734, %v1733
  %v1782 = vpack.c.b16 %v1736, %v1735
  %v1783 = vpack.c.b16 %v1738, %v1737
  %v1784 = vpack.c.b16 %v1740, %v1739
  %v1785 = vpack.c.b16 %v1742, %v1741
  %v1786 = vpack.c.b16 %v1744, %v1743
  %v1787 = vpack.c.b16 %v1746, %v1745
  %v1788 = vpack.c.b16 %v1748, %v1747
  %v1789 = vpack.c.b16 %v1750, %v1749
  %v1790 = vpack.c.b16 %v1752, %v1751
  %v1791 = vpack.c.b16 %v1754, %v1753
  %v1792 = vpack.c.b16 %v1756, %v1755
  %v1793 = vpack.c.b16 %v1758, %v1757
  %v1794 = vpack.c.b16 %v1760, %v1759
  %v1795 = vpack.c.b16 %v1762, %v1761
  %v1796 = vpack.c.b16 %v1764, %v1763
  %v1797 = vpack.c.b16 %v1766, %v1765
  %v1798 = vpack.c.b16 %v1768, %v1767
  %v1799 = vpack.c.b16 %v1770, %v1769
  %v1800 = vpack.c.b16 %v1772, %v1771
  %v1801 = vpack.c.b16 %v1774, %v1773
  %v1802 = vpack.c.b16 %v1776, %v1775
  %v1803 = vpack.c.b16 %v1778, %v1777
  %v1830 = vsel %vm1262, %v1621, 0
  %1832 = vmatprep.subr.bf16.mxu0 0
  %1833 = vmatpush1.bf16.msra.mxu0 %v1786
  %1834 = vmatprep.subr.bf16.mxu0 0
  %1835 = vmatpush1.bf16.msra.mxu0 %v1785
  %1836 = vmatprep.subr.bf16.mxu0 0
  %1837 = vmatpush1.bf16.msra.mxu0 %v1784
  %1838 = vmatprep.subr.bf16.mxu0 0
  %1839 = vmatpush1.bf16.msra.mxu0 %v1783
  %1840 = vmatprep.subr.bf16.mxu0 0
  %1841 = vmatpush1.bf16.msra.mxu0 %v1782
  %1842 = vmatprep.subr.bf16.mxu0 0
  %1843 = vmatpush1.bf16.msra.mxu0 %v1781
  %1844 = vmatprep.subr.bf16.mxu0 0
  %1845 = vmatpush1.bf16.msra.mxu0 %v1780
  %1846 = vmatprep.subr.bf16.mxu0 0
  %1847 = vmatpush1.bf16.msra.mxu0 %v1779
  %1848 = vmatprep.subr.bf16.mxu0 0
  %1849 = vmatpush2.bf16.msra.mxu0 %v1794
  %1850 = vmatprep.subr.bf16.mxu0 0
  %1851 = vmatpush2.bf16.msra.mxu0 %v1793
  %1852 = vmatprep.subr.bf16.mxu0 0
  %1853 = vmatpush2.bf16.msra.mxu0 %v1792
  %1854 = vmatprep.subr.bf16.mxu0 0
  %1855 = vmatpush2.bf16.msra.mxu0 %v1791
  %1856 = vmatprep.subr.bf16.mxu0 0
  %1857 = vmatpush2.bf16.msra.mxu0 %v1790
  %1858 = vmatprep.subr.bf16.mxu0 0
  %1859 = vmatpush2.bf16.msra.mxu0 %v1789
  %1860 = vmatprep.subr.bf16.mxu0 0
  %1861 = vmatpush2.bf16.msra.mxu0 %v1788
  %1862 = vmatprep.subr.bf16.mxu0 0
  %1863 = vmatpush2.bf16.msra.mxu0 %v1787
  %1864 = vmatprep.mubr.bf16.mxu0 %v1619
  %1865 = vmatmul.mubr.bf16.gmra.mxu0 %v1618
  %v1866 = vpop.f32.mrf.mxu0
  %v1867 = vadd.f32 %v1677, %v1866
  %v1868 = vpop.f32.mrf.mxu0
  %v1869 = vpop.f32.mrf.mxu0
  %v1870 = vadd.f32 %v1677, %v1869
  %v1871 = vpop.f32.mrf.mxu0
  %1872 = vdwg.mxu0
  %1873 = vmatprep.subr.bf16.mxu0 0
  %1874 = vmatpush1.bf16.msra.mxu0 %v1802
  %1875 = vmatprep.subr.bf16.mxu0 0
  %1876 = vmatpush1.bf16.msra.mxu0 %v1801
  %1877 = vmatprep.subr.bf16.mxu0 0
  %1878 = vmatpush1.bf16.msra.mxu0 %v1800
  %1879 = vmatprep.subr.bf16.mxu0 0
  %1880 = vmatpush1.bf16.msra.mxu0 %v1799
  %1881 = vmatprep.subr.bf16.mxu0 0
  %1882 = vmatpush1.bf16.msra.mxu0 %v1798
  %1883 = vmatprep.subr.bf16.mxu0 0
  %1884 = vmatpush1.bf16.msra.mxu0 %v1797
  %1885 = vmatprep.subr.bf16.mxu0 0
  %1886 = vmatpush1.bf16.msra.mxu0 %v1796
  %1887 = vmatprep.subr.bf16.mxu0 0
  %1888 = vmatpush1.bf16.msra.mxu0 %v1795
  %1889 = vmatprep.subr.bf16.mxu0 0
  %1890 = vmatpush2.bf16.msra.mxu0 0
  %1891 = vmatprep.subr.bf16.mxu0 0
  %1892 = vmatpush2.bf16.msra.mxu0 0
  %1893 = vmatprep.subr.bf16.mxu0 0
  %1894 = vmatpush2.bf16.msra.mxu0 0
  %1895 = vmatprep.subr.bf16.mxu0 0
  %1896 = vmatpush2.bf16.msra.mxu0 0
  %1897 = vmatprep.subr.bf16.mxu0 0
  %1898 = vmatpush2.bf16.msra.mxu0 0
  %1899 = vmatprep.subr.bf16.mxu0 0
  %1900 = vmatpush2.bf16.msra.mxu0 0
  %1901 = vmatprep.subr.bf16.mxu0 0
  %1902 = vmatpush2.bf16.msra.mxu0 0
  %1903 = vmatprep.subr.bf16.mxu0 0
  %1904 = vmatpush2.bf16.msra.mxu0 %v1803
  %1905 = vmatprep.mubr.bf16.mxu0 %v1830
  %1906 = vmatmul.mubr.bf16.gmra.mxu0 %v1620
  %v1907 = vpop.f32.mrf.mxu0
  %v1908 = vadd.f32 %v1867, %v1907
  %v1909 = vpop.f32.mrf.mxu0
  %v1910 = vpop.f32.mrf.mxu0
  %v1911 = vadd.f32 %v1870, %v1910
  %v1912 = vpop.f32.mrf.mxu0
  %1913 = vdwg.mxu0
  %v1914 = vlaneseq
  %v1915 = vand.u32 %v1914, 127
  %vm1916 = vcmp.lt.s32.totalorder %v1915, 32
  %vm1917 = vcmp.ge.s32.totalorder %v1915, 32
  %vm1918 = vcmp.lt.s32.totalorder %v1915, 48
  %vm1919 = vmand %vm1917, %vm1918
  %vm1920 = vcmp.ge.s32.totalorder %v1915, 48
  %vm1921 = vcmp.lt.s32.totalorder %v1915, 64
  %vm1922 = vmand %vm1920, %vm1921
  %vm1923 = vmor %vm1919, %vm1922
  %v1924 = vsel %vm1919, %v1908, -inf
  %v1925 = vsel %vm1919, %v1911, -inf
  %1926 = vmax.xlane.f32.xlu0 %v1924
  %v1927 = vpop.xlane.xlu0 %1926
  %1928 = vmax.xlane.f32.xlu0 %v1925
  %v1929 = vpop.xlane.xlu0 %1928
  %v1930 = vsel %vm1922, %v1908, -inf
  %v1931 = vsel %vm1922, %v1911, -inf
  %1932 = vmax.xlane.f32.xlu0 %v1930
  %v1933 = vpop.xlane.xlu0 %1932
  %1934 = vmax.xlane.f32.xlu0 %v1931
  %v1935 = vpop.xlane.xlu0 %1934
  %v1936 = vsel %vm1922, %v1933, 0.0
  %v1937 = vsel %vm1922, %v1935, 0.0
  %v1938 = vsel %vm1919, %v1927, %v1936
  %v1939 = vsel %vm1919, %v1929, %v1937
  %v1940 = vsub.f32 %v1908, %v1938
  %v1941 = vsub.f32 %v1911, %v1939
  %v1942 = vsel %vm1923, %v1940, 0.0
  %v1943 = vsel %vm1923, %v1941, 0.0
  %v1944 = vmul.f32 %v1942, 1.442695
  %v1945 = vpow.pop %v1944
  %v1946 = vmul.f32 %v1943, 1.442695
  %v1947 = vpow.pop %v1946
  %v1948 = vsel %vm1919, %v1945, 0.0
  %v1949 = vsel %vm1919, %v1947, 0.0
  %1950 = vadd.xlane.f32.xlu0 %v1948
  %v1951 = vpop.xlane.xlu0 %1950
  %1952 = vadd.xlane.f32.xlu0 %v1949
  %v1953 = vpop.xlane.xlu0 %1952
  %v1954 = vsel %vm1922, %v1945, 0.0
  %v1955 = vsel %vm1922, %v1947, 0.0
  %1956 = vadd.xlane.f32.xlu0 %v1954
  %v1957 = vpop.xlane.xlu0 %1956
  %1958 = vadd.xlane.f32.xlu0 %v1955
  %v1959 = vpop.xlane.xlu0 %1958
  %v1960 = vsel %vm1922, %v1957, 1.0
  %v1961 = vsel %vm1922, %v1959, 1.0
  %v1962 = vsel %vm1919, %v1951, %v1960
  %v1963 = vsel %vm1919, %v1953, %v1961
  %v1964 = vsel %vm1922, 16.0, 0.0
  %v1965 = vsel %vm1919, 16.0, %v1964
  %v1966 = vmul.f32 %v1945, %v1965
  %v1967 = vmul.f32 %v1947, %v1965
  %v1968 = vrcp.pop %v1962
  %v1969 = vmul.f32 %v1966, %v1968
  %v1970 = vrcp.pop %v1963
  %v1971 = vmul.f32 %v1967, %v1970
  %v1972 = vadd.f32 %v1969, 1e-06
  %v1973 = vadd.f32 %v1971, 1e-06
  %v1974 = vsel %vm1923, %v1972, 0.0
  %v1975 = vsel %vm1923, %v1973, 0.0
  %v1976 = vsel %vm1916, %v1908, %v1974
  %v1977 = vsel %vm1916, %v1911, %v1975
  %1978 = vst [vmem:[%s5] sm:$0xff] %v1976
  %1979 = vst [vmem:[%s5 + $0x8] sm:$0xff] %v1977
  // Predicated region
  $region22: #{mnist_encoder_plus.1} parent=0 // pred_check
    _
  $region23: #{mnist_encoder_plus.1} parent=0 // pred_check_branch
    %1981 = sbr.rel (0) target = $region25
  $region24: #{mnist_encoder_plus.1} parent=0 // pred_region
    _
  $region25: #{mnist_encoder_plus.1} parent=0 // pred_fallthru
    _
  // Predicated region
  $region26: #{mnist_encoder_plus.1} parent=0 // pred_check
    _
  $region27: #{mnist_encoder_plus.1} parent=0 // pred_check_branch
    %1983 = sbr.rel (0) target = $region29
  $region28: #{mnist_encoder_plus.1} parent=0 // pred_region
    _
  $region29: #{mnist_encoder_plus.1} parent=0 // pred_fallthru
    _

</llo_original>
